<compile_context>
chip_gen: v7x
topology: tpu7x:2x2x1
jax: 0.10.0
libtpu: 0.0.40
codegen_flags: <defaults>
</compile_context>

<pallas_src>
import functools

import jax
import jax.numpy as jnp
from jax import lax
from jax.experimental import pallas as pl
from jax.experimental.pallas import tpu as pltpu


# tap order (kh, kw) of ConvTranspose2d(3, stride=2, pad=1, outpad=1):
#   group A (source pixel (i, j), unshifted):   (1,1) (1,2) (2,1) (2,2)
#   group B (shifted source pixels):            (1,0) (2,0)  -> (i,   j+1)
#                                               (0,1) (0,2)  -> (i+1, j  )
#                                               (0,0)        -> (i+1, j+1)
_TAPS_A = ((1, 1), (1, 2), (2, 1), (2, 2))
_TAPS_B = ((1, 0), (2, 0), (0, 1), (0, 2), (0, 0))

_LANE = 128


def _round_up(x, m):
    return (x + m - 1) // m * m


def _decoder_kernel(x_ref, mask_ref, w1_ref, b1_ref, w2a_ref, w2b_ref, b2_ref,
                    w3_ref, b3_ref, out_ref, tb_ref, *, H, W):
    HW = H * W
    c4p = w3_ref.shape[0]

    # conv1 (1x1, BN1 folded) + relu1
    y1 = jnp.dot(x_ref[...], w1_ref[...], preferred_element_type=jnp.float32)
    y1 = jnp.maximum(y1 + b1_ref[...], 0.0).astype(jnp.bfloat16)          # (HW, c4p)

    # deconv taps: unshifted group stays in registers; shifted group is written once
    # into the scratch whose trailing W+1 rows are kept zero so the +W / +W+1 shifts
    # at the last image row land in the zero pad.
    ta = jnp.dot(y1, w2a_ref[...], preferred_element_type=jnp.float32)    # (HW, 4*c4p)
    tb_ref[pl.ds(0, HW), :] = jnp.dot(y1, w2b_ref[...],
                                      preferred_element_type=jnp.float32)
    tb_ref[pl.ds(HW, W + 1), :] = jnp.zeros((W + 1, tb_ref.shape[1]), jnp.float32)

    # shifted tap outputs as offset window loads (p = i*W + j):
    #   p+1   -> (i,   j+1)   masked at j == W-1
    #   p+W   -> (i+1, j  )   last row falls into the zero pad
    #   p+W+1 -> (i+1, j+1)   masked at j == W-1
    m = mask_ref[...]                                                     # (HW, 1)
    tj = tb_ref[pl.ds(1, HW), pl.ds(0, 2 * c4p)] * m                      # taps (1,0),(2,0)
    ti = tb_ref[pl.ds(W, HW), pl.ds(2 * c4p, 2 * c4p)]                    # taps (0,1),(0,2)
    tij = tb_ref[pl.ds(W + 1, HW), pl.ds(4 * c4p, c4p)] * m               # tap  (0,0)

    planes = (
        ta[:, 0 * c4p:1 * c4p],                                           # ee
        ta[:, 1 * c4p:2 * c4p] + tj[:, :c4p],                             # eo
        ta[:, 2 * c4p:3 * c4p] + ti[:, :c4p],                             # oe
        ta[:, 3 * c4p:4 * c4p] + tj[:, c4p:] + ti[:, c4p:] + tij,         # oo
    )

    # bn2-folded bias + relu2 + conv3 (BN3 folded) + relu3 per parity plane; each
    # result is stored directly into its (HW, nfp) slab of the lane-dense output.
    b2 = b2_ref[...]
    w3 = w3_ref[...]
    b3 = b3_ref[...]
    for p in range(4):
        z = jnp.maximum(planes[p] + b2, 0.0).astype(jnp.bfloat16)
        r = jnp.dot(z, w3, preferred_element_type=jnp.float32)
        out_ref[p] = jnp.maximum(r + b3, 0.0).astype(out_ref.dtype)


def _fold_bn(gamma, beta, mean, var, eps=1e-5):
    s = gamma / jnp.sqrt(var + eps)
    t = beta - mean * s
    return s, t


def _pad_axis(a, axis, new_size):
    pad = new_size - a.shape[axis]
    if pad == 0:
        return a
    widths = [(0, 0)] * a.ndim
    widths[axis] = (0, pad)
    return jnp.pad(a, widths)


def _vmem_limit_bytes():
    # Raise the scoped-VMEM cap on 128 MiB parts (v5e/v6e); stay conservative on
    # 64 MiB parts (v7x).
    try:
        cap = getattr(pltpu.get_tpu_info(), "vmem_capacity_bytes", None)
    except Exception:
        cap = None
    if not cap:
        return 64 * 1024 * 1024
    return min(int(cap) * 3 // 4, 100 * 1024 * 1024)


def decoder_block(x_nchw, p, eps=1e-5):
    N, Cin, H, W = x_nchw.shape
    c4 = p["w1"].shape[0]
    nf = p["w3"].shape[0]
    HW = H * W
    c4p = _round_up(c4, _LANE)
    nfp = _round_up(nf, _LANE)

    s1, t1 = _fold_bn(p["g1"], p["be1"], p["m1"], p["v1"], eps)
    s2, t2 = _fold_bn(p["g2"], p["be2"], p["m2"], p["v2"], eps)
    s3, t3 = _fold_bn(p["g3"], p["be3"], p["m3"], p["v3"], eps)

    # conv1 weight (c4, Cin, 1, 1) -> (Cin, c4p), BN1 folded, zero-padded lanes.
    w1f = _pad_axis(jnp.transpose(p["w1"][:, :, 0, 0], (1, 0)) * s1[None, :],
                    1, c4p).astype(jnp.bfloat16)
    b1f = _pad_axis((p["b1"] * s1 + t1)[None, :], 1, c4p).astype(jnp.float32)

    # ConvTranspose2d weight (ic=c4, oc=c4, 3, 3) -> per-tap (c4p, c4p) matrices,
    # BN2 folded into oc, concatenated along oc in group-A / group-B order.
    w2t = jnp.transpose(p["w2"], (2, 3, 0, 1)) * s2[None, None, None, :]
    w2t = _pad_axis(_pad_axis(w2t, 2, c4p), 3, c4p)
    w2af = jnp.concatenate([w2t[kh, kw] for kh, kw in _TAPS_A],
                           axis=-1).astype(jnp.bfloat16)                  # (c4p, 4*c4p)
    w2bf = jnp.concatenate([w2t[kh, kw] for kh, kw in _TAPS_B],
                           axis=-1).astype(jnp.bfloat16)                  # (c4p, 5*c4p)
    b2f = _pad_axis((p["b2"] * s2 + t2)[None, :], 1, c4p).astype(jnp.float32)

    # conv3 weight (nf, c4, 1, 1) -> (c4p, nfp), BN3 folded.
    w3f = _pad_axis(_pad_axis(jnp.transpose(p["w3"][:, :, 0, 0], (1, 0)) * s3[None, :],
                              0, c4p), 1, nfp).astype(jnp.bfloat16)
    b3f = _pad_axis((p["b3"] * s3 + t3)[None, :], 1, nfp).astype(jnp.float32)

    # grid-invariant boundary mask (0.0 at j == W-1), hoisted out of the kernel.
    col = jnp.arange(HW, dtype=jnp.int32) % W
    mask = (col < (W - 1)).astype(jnp.float32).reshape(HW, 1)

    # NCHW -> flattened (N, H*W, Cin) activation rows, bf16 for the MXU.
    x = jnp.transpose(x_nchw, (0, 2, 3, 1)).reshape(N, HW, Cin).astype(jnp.bfloat16)

    kernel = functools.partial(_decoder_kernel, H=H, W=W)

    flops = 2 * N * HW * (Cin * c4p + 9 * c4p * c4p + 4 * c4p * nfp)
    bytes_accessed = (x.size * 2 + mask.size * 4
                      + (w1f.size + w2af.size + w2bf.size + w3f.size) * 2
                      + (b1f.size + b2f.size + b3f.size) * 4
                      + N * 4 * HW * nfp * 2)

    out = pl.pallas_call(
        kernel,
        out_shape=jax.ShapeDtypeStruct((N, 4, HW, nfp), jnp.bfloat16),
        grid=(N,),
        in_specs=[
            pl.BlockSpec((None, HW, Cin), lambda n: (n, 0, 0)),
            pl.BlockSpec((HW, 1), lambda n: (0, 0)),
            pl.BlockSpec((Cin, c4p), lambda n: (0, 0)),
            pl.BlockSpec((1, c4p), lambda n: (0, 0)),
            pl.BlockSpec((c4p, 4 * c4p), lambda n: (0, 0)),
            pl.BlockSpec((c4p, 5 * c4p), lambda n: (0, 0)),
            pl.BlockSpec((1, c4p), lambda n: (0, 0)),
            pl.BlockSpec((c4p, nfp), lambda n: (0, 0)),
            pl.BlockSpec((1, nfp), lambda n: (0, 0)),
        ],
        out_specs=pl.BlockSpec((None, 4, HW, nfp), lambda n: (n, 0, 0, 0)),
        scratch_shapes=[pltpu.VMEM((HW + W + 1, 5 * c4p), jnp.float32)],
        compiler_params=pltpu.CompilerParams(
            dimension_semantics=("parallel",),
            vmem_limit_bytes=_vmem_limit_bytes()),
        cost_estimate=pl.CostEstimate(flops=flops, transcendentals=0,
                                      bytes_accessed=bytes_accessed),
    )(x, mask, w1f, b1f, w2af, w2bf, b2f, w3f, b3f)

    # kernel output out[n, 2r+s, i*W+j, c] -> NCHW via ONE transpose; drop channel pad.
    out = out.astype(jnp.float32).reshape(N, 2, 2, H, W, nfp)   # (n, r, s, i, j, c)
    out = jnp.transpose(out, (0, 5, 3, 1, 4, 2))                # (n, c, i, r, j, s)
    return out.reshape(N, nfp, 2 * H, 2 * W)[:, :nf]


def ref_decoder_block(x, p, eps=1e-5):
    """Pure-JAX (lax conv) reference, eval-mode BN."""
    def bn(y, g, b, m, v):
        return (g[None, :, None, None] * (y - m[None, :, None, None])
                / jnp.sqrt(v + eps)[None, :, None, None] + b[None, :, None, None])

    dn = ("NCHW", "OIHW", "NCHW")
    y = lax.conv_general_dilated(x, p["w1"], (1, 1), "VALID", dimension_numbers=dn)
    y = y + p["b1"][None, :, None, None]
    y = jax.nn.relu(bn(y, p["g1"], p["be1"], p["m1"], p["v1"]))

    # ConvTranspose2d(3, stride=2, padding=1, output_padding=1) as dilated conv
    w2t = jnp.transpose(jnp.flip(p["w2"], axis=(2, 3)), (1, 0, 2, 3))
    y = lax.conv_general_dilated(y, w2t, (1, 1), ((1, 2), (1, 2)),
                                 lhs_dilation=(2, 2), dimension_numbers=dn)
    y = y + p["b2"][None, :, None, None]
    y = jax.nn.relu(bn(y, p["g2"], p["be2"], p["m2"], p["v2"]))

    y = lax.conv_general_dilated(y, p["w3"], (1, 1), "VALID", dimension_numbers=dn)
    y = y + p["b3"][None, :, None, None]
    y = jax.nn.relu(bn(y, p["g3"], p["be3"], p["m3"], p["v3"]))
    return y


def init_params(key, in_channels, n_filters):
    c4 = in_channels // 4
    keys = iter(jax.random.split(key, 32))

    def nrm(shape, scale=0.1):
        return scale * jax.random.normal(next(keys), shape, jnp.float32)

    def bn(c):
        return (1.0 + nrm((c,)), nrm((c,), 0.05), nrm((c,), 0.05),
                0.5 + jnp.abs(nrm((c,), 0.2)))

    p = {}
    p["w1"] = nrm((c4, in_channels, 1, 1))
    p["b1"] = nrm((c4,), 0.05)
    p["g1"], p["be1"], p["m1"], p["v1"] = bn(c4)
    p["w2"] = nrm((c4, c4, 3, 3))          # ConvTranspose2d weight: (in, out, kh, kw)
    p["b2"] = nrm((c4,), 0.05)
    p["g2"], p["be2"], p["m2"], p["v2"] = bn(c4)
    p["w3"] = nrm((n_filters, c4, 1, 1))
    p["b3"] = nrm((n_filters,), 0.05)
    p["g3"], p["be3"], p["m3"], p["v3"] = bn(n_filters)
    return p


if __name__ == "__main__":
    key = jax.random.PRNGKey(0)
    kx, kp = jax.random.split(key)

    N, Cin, H, W = 2, 32, 8, 8
    n_filters = 16

    x = jax.random.normal(kx, (N, Cin, H, W), jnp.float32)
    params = init_params(kp, Cin, n_filters)

    out = jax.block_until_ready(decoder_block(x, params))
    assert out.shape == (N, n_filters, 2 * H, 2 * W), out.shape

    ref = ref_decoder_block(x, params)
    err = float(jnp.max(jnp.abs(out - ref)))
    # bf16 matmul operands + bf16 output store (f32 accumulation) -> loose tolerance
    if not jnp.allclose(out, ref, atol=3e-2, rtol=3e-2):
        raise AssertionError("mismatch vs reference, max abs diff = %e" % err)

    print("KERNEL_OK")
</pallas_src>

<mosaic_0001>
module attributes {stable_mosaic.version = 11 : i64} {
  func.func @_decoder_kernel(%arg0: i32, %arg1: memref<1x64x32xbf16, #tpu.memory_space<vmem>>, %arg2: memref<64x1xf32, #tpu.memory_space<vmem>>, %arg3: memref<32x128xbf16, #tpu.memory_space<vmem>>, %arg4: memref<1x128xf32, #tpu.memory_space<vmem>>, %arg5: memref<128x512xbf16, #tpu.memory_space<vmem>>, %arg6: memref<128x640xbf16, #tpu.memory_space<vmem>>, %arg7: memref<1x128xf32, #tpu.memory_space<vmem>>, %arg8: memref<128x128xbf16, #tpu.memory_space<vmem>>, %arg9: memref<1x128xf32, #tpu.memory_space<vmem>>, %arg10: memref<1x4x64x128xbf16, #tpu.memory_space<vmem>>, %arg11: memref<73x640xf32, #tpu.memory_space<vmem>>) attributes {dimension_semantics = [#tpu.dimension_semantics<parallel>], iteration_bounds = array<i64: 2>, scalar_prefetch = 0 : i64, scratch_operands = 1 : i64, tpu.core_type = #tpu.core_type<tc>, window_params = [{transform_indices = @transform_0, window_bounds = array<i64: 1, 64, 32>}, {pipeline_mode = #tpu.pipeline_mode<synchronous>, transform_indices = @transform_1, window_bounds = array<i64: 64, 1>}, {pipeline_mode = #tpu.pipeline_mode<synchronous>, transform_indices = @transform_2, window_bounds = array<i64: 32, 128>}, {pipeline_mode = #tpu.pipeline_mode<synchronous>, transform_indices = @transform_3, window_bounds = array<i64: 1, 128>}, {pipeline_mode = #tpu.pipeline_mode<synchronous>, transform_indices = @transform_4, window_bounds = array<i64: 128, 512>}, {pipeline_mode = #tpu.pipeline_mode<synchronous>, transform_indices = @transform_5, window_bounds = array<i64: 128, 640>}, {pipeline_mode = #tpu.pipeline_mode<synchronous>, transform_indices = @transform_6, window_bounds = array<i64: 1, 128>}, {pipeline_mode = #tpu.pipeline_mode<synchronous>, transform_indices = @transform_7, window_bounds = array<i64: 128, 128>}, {pipeline_mode = #tpu.pipeline_mode<synchronous>, transform_indices = @transform_8, window_bounds = array<i64: 1, 128>}, {transform_indices = @transform_9, window_bounds = array<i64: 1, 4, 64, 128>}]} {
    %c0 = arith.constant 0 : index
    %c0_0 = arith.constant 0 : index
    %c0_1 = arith.constant 0 : index
    %0 = vector.load %arg1[%c0, %c0_0, %c0_1] : memref<1x64x32xbf16, #tpu.memory_space<vmem>>, vector<1x64x32xbf16>
    %1 = vector.shape_cast %0 : vector<1x64x32xbf16> to vector<64x32xbf16>
    %c0_2 = arith.constant 0 : index
    %c0_3 = arith.constant 0 : index
    %2 = vector.load %arg3[%c0_2, %c0_3] : memref<32x128xbf16, #tpu.memory_space<vmem>>, vector<32x128xbf16>
    %cst = arith.constant dense<0.000000e+00> : vector<64x128xf32>
    %3 = tpu.matmul %1, %2, %cst {dimension_numbers = #tpu.dot_dimension_numbers<[1], [0], [0], [1], [0, 0, 1, 1], [], []>} : vector<64x32xbf16>, vector<32x128xbf16>, vector<64x128xf32> -> vector<64x128xf32>
    %c0_4 = arith.constant 0 : index
    %c0_5 = arith.constant 0 : index
    %4 = vector.load %arg4[%c0_4, %c0_5] : memref<1x128xf32, #tpu.memory_space<vmem>>, vector<1x128xf32>
    %5 = vector.broadcast %4 : vector<1x128xf32> to vector<64x128xf32>
    %6 = arith.addf %3, %5 : vector<64x128xf32>
    %cst_6 = arith.constant 0.000000e+00 : f32
    %7 = vector.broadcast %cst_6 : f32 to vector<64x128xf32>
    %8 = arith.maximumf %6, %7 : vector<64x128xf32>
    %9 = arith.truncf %8 : vector<64x128xf32> to vector<64x128xbf16>
    %c0_7 = arith.constant 0 : index
    %c0_8 = arith.constant 0 : index
    %10 = vector.load %arg5[%c0_7, %c0_8] : memref<128x512xbf16, #tpu.memory_space<vmem>>, vector<128x512xbf16>
    %cst_9 = arith.constant dense<0.000000e+00> : vector<64x512xf32>
    %11 = tpu.matmul %9, %10, %cst_9 {dimension_numbers = #tpu.dot_dimension_numbers<[1], [0], [0], [1], [0, 0, 1, 1], [], []>} : vector<64x128xbf16>, vector<128x512xbf16>, vector<64x512xf32> -> vector<64x512xf32>
    %c0_10 = arith.constant 0 : index
    %c0_11 = arith.constant 0 : index
    %12 = vector.load %arg6[%c0_10, %c0_11] : memref<128x640xbf16, #tpu.memory_space<vmem>>, vector<128x640xbf16>
    %cst_12 = arith.constant dense<0.000000e+00> : vector<64x640xf32>
    %13 = tpu.matmul %9, %12, %cst_12 {dimension_numbers = #tpu.dot_dimension_numbers<[1], [0], [0], [1], [0, 0, 1, 1], [], []>} : vector<64x128xbf16>, vector<128x640xbf16>, vector<64x640xf32> -> vector<64x640xf32>
    %c0_13 = arith.constant 0 : index
    %c0_14 = arith.constant 0 : index
    %14 = vector.load %arg11[%c0_13, %c0_14] : memref<73x640xf32, #tpu.memory_space<vmem>>, vector<64x640xf32>
    tpu.vector_store %arg11[%c0_13, %c0_14], %13 {strides = array<i32>} : memref<73x640xf32, #tpu.memory_space<vmem>>, vector<64x640xf32>,
    %cst_15 = arith.constant 0.000000e+00 : f32
    %15 = vector.broadcast %cst_15 : f32 to vector<9x640xf32>
    %c64 = arith.constant 64 : index
    %c0_16 = arith.constant 0 : index
    %16 = vector.load %arg11[%c64, %c0_16] : memref<73x640xf32, #tpu.memory_space<vmem>>, vector<9x640xf32>
    tpu.vector_store %arg11[%c64, %c0_16], %15 {strides = array<i32>} : memref<73x640xf32, #tpu.memory_space<vmem>>, vector<9x640xf32>,
    %c0_17 = arith.constant 0 : index
    %c0_18 = arith.constant 0 : index
    %17 = vector.load %arg2[%c0_17, %c0_18] : memref<64x1xf32, #tpu.memory_space<vmem>>, vector<64x1xf32>
    %c1 = arith.constant 1 : index
    %c0_19 = arith.constant 0 : index
    %18 = vector.load %arg11[%c1, %c0_19] : memref<73x640xf32, #tpu.memory_space<vmem>>, vector<64x256xf32>
    %19 = vector.broadcast %17 : vector<64x1xf32> to vector<64x256xf32>
    %20 = arith.mulf %18, %19 : vector<64x256xf32>
    %c8 = arith.constant 8 : index
    %c256 = arith.constant 256 : index
    %21 = vector.load %arg11[%c8, %c256] : memref<73x640xf32, #tpu.memory_space<vmem>>, vector<64x256xf32>
    %c9 = arith.constant 9 : index
    %c512 = arith.constant 512 : index
    %22 = vector.load %arg11[%c9, %c512] : memref<73x640xf32, #tpu.memory_space<vmem>>, vector<64x128xf32>
    %23 = vector.broadcast %17 : vector<64x1xf32> to vector<64x128xf32>
    %24 = arith.mulf %22, %23 : vector<64x128xf32>
    %25 = vector.extract_strided_slice %11 {offsets = [0, 0], sizes = [64, 128], strides = [1, 1]} : vector<64x512xf32> to vector<64x128xf32>
    %26 = vector.extract_strided_slice %11 {offsets = [0, 128], sizes = [64, 128], strides = [1, 1]} : vector<64x512xf32> to vector<64x128xf32>
    %27 = vector.extract_strided_slice %20 {offsets = [0, 0], sizes = [64, 128], strides = [1, 1]} : vector<64x256xf32> to vector<64x128xf32>
    %28 = arith.addf %26, %27 : vector<64x128xf32>
    %29 = vector.extract_strided_slice %11 {offsets = [0, 256], sizes = [64, 128], strides = [1, 1]} : vector<64x512xf32> to vector<64x128xf32>
    %30 = vector.extract_strided_slice %21 {offsets = [0, 0], sizes = [64, 128], strides = [1, 1]} : vector<64x256xf32> to vector<64x128xf32>
    %31 = arith.addf %29, %30 : vector<64x128xf32>
    %32 = vector.extract_strided_slice %11 {offsets = [0, 384], sizes = [64, 128], strides = [1, 1]} : vector<64x512xf32> to vector<64x128xf32>
    %33 = vector.extract_strided_slice %20 {offsets = [0, 128], sizes = [64, 128], strides = [1, 1]} : vector<64x256xf32> to vector<64x128xf32>
    %34 = arith.addf %32, %33 : vector<64x128xf32>
    %35 = vector.extract_strided_slice %21 {offsets = [0, 128], sizes = [64, 128], strides = [1, 1]} : vector<64x256xf32> to vector<64x128xf32>
    %36 = arith.addf %34, %35 : vector<64x128xf32>
    %37 = arith.addf %36, %24 : vector<64x128xf32>
    %c0_20 = arith.constant 0 : index
    %c0_21 = arith.constant 0 : index
    %38 = vector.load %arg7[%c0_20, %c0_21] : memref<1x128xf32, #tpu.memory_space<vmem>>, vector<1x128xf32>
    %c0_22 = arith.constant 0 : index
    %c0_23 = arith.constant 0 : index
    %39 = vector.load %arg8[%c0_22, %c0_23] : memref<128x128xbf16, #tpu.memory_space<vmem>>, vector<128x128xbf16>
    %c0_24 = arith.constant 0 : index
    %c0_25 = arith.constant 0 : index
    %40 = vector.load %arg9[%c0_24, %c0_25] : memref<1x128xf32, #tpu.memory_space<vmem>>, vector<1x128xf32>
    %41 = vector.broadcast %38 : vector<1x128xf32> to vector<64x128xf32>
    %42 = arith.addf %25, %41 : vector<64x128xf32>
    %cst_26 = arith.constant 0.000000e+00 : f32
    %43 = vector.broadcast %cst_26 : f32 to vector<64x128xf32>
    %44 = arith.maximumf %42, %43 : vector<64x128xf32>
    %45 = arith.truncf %44 : vector<64x128xf32> to vector<64x128xbf16>
    %cst_27 = arith.constant dense<0.000000e+00> : vector<64x128xf32>
    %46 = tpu.matmul %45, %39, %cst_27 {dimension_numbers = #tpu.dot_dimension_numbers<[1], [0], [0], [1], [0, 0, 1, 1], [], []>} : vector<64x128xbf16>, vector<128x128xbf16>, vector<64x128xf32> -> vector<64x128xf32>
    %47 = vector.broadcast %40 : vector<1x128xf32> to vector<64x128xf32>
    %48 = arith.addf %46, %47 : vector<64x128xf32>
    %cst_28 = arith.constant 0.000000e+00 : f32
    %49 = vector.broadcast %cst_28 : f32 to vector<64x128xf32>
    %50 = arith.maximumf %48, %49 : vector<64x128xf32>
    %51 = arith.truncf %50 : vector<64x128xf32> to vector<64x128xbf16>
    %c0_29 = arith.constant 0 : index
    %c0_30 = arith.constant 0 : index
    %c0_31 = arith.constant 0 : index
    %c0_32 = arith.constant 0 : index
    %52 = vector.load %arg10[%c0_29, %c0_30, %c0_31, %c0_32] : memref<1x4x64x128xbf16, #tpu.memory_space<vmem>>, vector<1x1x64x128xbf16>
    %53 = vector.shape_cast %52 : vector<1x1x64x128xbf16> to vector<64x128xbf16>
    %54 = vector.shape_cast %51 : vector<64x128xbf16> to vector<1x1x64x128xbf16>
    tpu.vector_store %arg10[%c0_29, %c0_30, %c0_31, %c0_32], %54 {strides = array<i32>} : memref<1x4x64x128xbf16, #tpu.memory_space<vmem>>, vector<1x1x64x128xbf16>,
    %55 = vector.broadcast %38 : vector<1x128xf32> to vector<64x128xf32>
    %56 = arith.addf %28, %55 : vector<64x128xf32>
    %cst_33 = arith.constant 0.000000e+00 : f32
    %57 = vector.broadcast %cst_33 : f32 to vector<64x128xf32>
    %58 = arith.maximumf %56, %57 : vector<64x128xf32>
    %59 = arith.truncf %58 : vector<64x128xf32> to vector<64x128xbf16>
    %cst_34 = arith.constant dense<0.000000e+00> : vector<64x128xf32>
    %60 = tpu.matmul %59, %39, %cst_34 {dimension_numbers = #tpu.dot_dimension_numbers<[1], [0], [0], [1], [0, 0, 1, 1], [], []>} : vector<64x128xbf16>, vector<128x128xbf16>, vector<64x128xf32> -> vector<64x128xf32>
    %61 = vector.broadcast %40 : vector<1x128xf32> to vector<64x128xf32>
    %62 = arith.addf %60, %61 : vector<64x128xf32>
    %cst_35 = arith.constant 0.000000e+00 : f32
    %63 = vector.broadcast %cst_35 : f32 to vector<64x128xf32>
    %64 = arith.maximumf %62, %63 : vector<64x128xf32>
    %65 = arith.truncf %64 : vector<64x128xf32> to vector<64x128xbf16>
    %c0_36 = arith.constant 0 : index
    %c1_37 = arith.constant 1 : index
    %c0_38 = arith.constant 0 : index
    %c0_39 = arith.constant 0 : index
    %66 = vector.load %arg10[%c0_36, %c1_37, %c0_38, %c0_39] : memref<1x4x64x128xbf16, #tpu.memory_space<vmem>>, vector<1x1x64x128xbf16>
    %67 = vector.shape_cast %66 : vector<1x1x64x128xbf16> to vector<64x128xbf16>
    %68 = vector.shape_cast %65 : vector<64x128xbf16> to vector<1x1x64x128xbf16>
    tpu.vector_store %arg10[%c0_36, %c1_37, %c0_38, %c0_39], %68 {strides = array<i32>} : memref<1x4x64x128xbf16, #tpu.memory_space<vmem>>, vector<1x1x64x128xbf16>,
    %69 = vector.broadcast %38 : vector<1x128xf32> to vector<64x128xf32>
    %70 = arith.addf %31, %69 : vector<64x128xf32>
    %cst_40 = arith.constant 0.000000e+00 : f32
    %71 = vector.broadcast %cst_40 : f32 to vector<64x128xf32>
    %72 = arith.maximumf %70, %71 : vector<64x128xf32>
    %73 = arith.truncf %72 : vector<64x128xf32> to vector<64x128xbf16>
    %cst_41 = arith.constant dense<0.000000e+00> : vector<64x128xf32>
    %74 = tpu.matmul %73, %39, %cst_41 {dimension_numbers = #tpu.dot_dimension_numbers<[1], [0], [0], [1], [0, 0, 1, 1], [], []>} : vector<64x128xbf16>, vector<128x128xbf16>, vector<64x128xf32> -> vector<64x128xf32>
    %75 = vector.broadcast %40 : vector<1x128xf32> to vector<64x128xf32>
    %76 = arith.addf %74, %75 : vector<64x128xf32>
    %cst_42 = arith.constant 0.000000e+00 : f32
    %77 = vector.broadcast %cst_42 : f32 to vector<64x128xf32>
    %78 = arith.maximumf %76, %77 : vector<64x128xf32>
    %79 = arith.truncf %78 : vector<64x128xf32> to vector<64x128xbf16>
    %c0_43 = arith.constant 0 : index
    %c2 = arith.constant 2 : index
    %c0_44 = arith.constant 0 : index
    %c0_45 = arith.constant 0 : index
    %80 = vector.load %arg10[%c0_43, %c2, %c0_44, %c0_45] : memref<1x4x64x128xbf16, #tpu.memory_space<vmem>>, vector<1x1x64x128xbf16>
    %81 = vector.shape_cast %80 : vector<1x1x64x128xbf16> to vector<64x128xbf16>
    %82 = vector.shape_cast %79 : vector<64x128xbf16> to vector<1x1x64x128xbf16>
    tpu.vector_store %arg10[%c0_43, %c2, %c0_44, %c0_45], %82 {strides = array<i32>} : memref<1x4x64x128xbf16, #tpu.memory_space<vmem>>, vector<1x1x64x128xbf16>,
    %83 = vector.broadcast %38 : vector<1x128xf32> to vector<64x128xf32>
    %84 = arith.addf %37, %83 : vector<64x128xf32>
    %cst_46 = arith.constant 0.000000e+00 : f32
    %85 = vector.broadcast %cst_46 : f32 to vector<64x128xf32>
    %86 = arith.maximumf %84, %85 : vector<64x128xf32>
    %87 = arith.truncf %86 : vector<64x128xf32> to vector<64x128xbf16>
    %cst_47 = arith.constant dense<0.000000e+00> : vector<64x128xf32>
    %88 = tpu.matmul %87, %39, %cst_47 {dimension_numbers = #tpu.dot_dimension_numbers<[1], [0], [0], [1], [0, 0, 1, 1], [], []>} : vector<64x128xbf16>, vector<128x128xbf16>, vector<64x128xf32> -> vector<64x128xf32>
    %89 = vector.broadcast %40 : vector<1x128xf32> to vector<64x128xf32>
    %90 = arith.addf %88, %89 : vector<64x128xf32>
    %cst_48 = arith.constant 0.000000e+00 : f32
    %91 = vector.broadcast %cst_48 : f32 to vector<64x128xf32>
    %92 = arith.maximumf %90, %91 : vector<64x128xf32>
    %93 = arith.truncf %92 : vector<64x128xf32> to vector<64x128xbf16>
    %c0_49 = arith.constant 0 : index
    %c3 = arith.constant 3 : index
    %c0_50 = arith.constant 0 : index
    %c0_51 = arith.constant 0 : index
    %94 = vector.load %arg10[%c0_49, %c3, %c0_50, %c0_51] : memref<1x4x64x128xbf16, #tpu.memory_space<vmem>>, vector<1x1x64x128xbf16>
    %95 = vector.shape_cast %94 : vector<1x1x64x128xbf16> to vector<64x128xbf16>
    %96 = vector.shape_cast %93 : vector<64x128xbf16> to vector<1x1x64x128xbf16>
    tpu.vector_store %arg10[%c0_49, %c3, %c0_50, %c0_51], %96 {strides = array<i32>} : memref<1x4x64x128xbf16, #tpu.memory_space<vmem>>, vector<1x1x64x128xbf16>,
    return
  }
  func.func @transform_0(%arg0: i32) -> (i32, i32, i32) {
    %c0_i32 = arith.constant 0 : i32
    %c0_i32_0 = arith.constant 0 : i32
    %c0_i32_1 = arith.constant 0 : i32
    return %arg0, %c0_i32, %c0_i32_0 : i32, i32, i32
  }
  func.func @transform_1(%arg0: i32) -> (i32, i32) {
    %c0_i32 = arith.constant 0 : i32
    %c0_i32_0 = arith.constant 0 : i32
    %c0_i32_1 = arith.constant 0 : i32
    return %c0_i32, %c0_i32_0 : i32, i32
  }
  func.func @transform_2(%arg0: i32) -> (i32, i32) {
    %c0_i32 = arith.constant 0 : i32
    %c0_i32_0 = arith.constant 0 : i32
    %c0_i32_1 = arith.constant 0 : i32
    return %c0_i32, %c0_i32_0 : i32, i32
  }
  func.func @transform_3(%arg0: i32) -> (i32, i32) {
    %c0_i32 = arith.constant 0 : i32
    %c0_i32_0 = arith.constant 0 : i32
    %c0_i32_1 = arith.constant 0 : i32
    return %c0_i32, %c0_i32_0 : i32, i32
  }
  func.func @transform_4(%arg0: i32) -> (i32, i32) {
    %c0_i32 = arith.constant 0 : i32
    %c0_i32_0 = arith.constant 0 : i32
    %c0_i32_1 = arith.constant 0 : i32
    return %c0_i32, %c0_i32_0 : i32, i32
  }
  func.func @transform_5(%arg0: i32) -> (i32, i32) {
    %c0_i32 = arith.constant 0 : i32
    %c0_i32_0 = arith.constant 0 : i32
    %c0_i32_1 = arith.constant 0 : i32
    return %c0_i32, %c0_i32_0 : i32, i32
  }
  func.func @transform_6(%arg0: i32) -> (i32, i32) {
    %c0_i32 = arith.constant 0 : i32
    %c0_i32_0 = arith.constant 0 : i32
    %c0_i32_1 = arith.constant 0 : i32
    return %c0_i32, %c0_i32_0 : i32, i32
  }
  func.func @transform_7(%arg0: i32) -> (i32, i32) {
    %c0_i32 = arith.constant 0 : i32
    %c0_i32_0 = arith.constant 0 : i32
    %c0_i32_1 = arith.constant 0 : i32
    return %c0_i32, %c0_i32_0 : i32, i32
  }
  func.func @transform_8(%arg0: i32) -> (i32, i32) {
    %c0_i32 = arith.constant 0 : i32
    %c0_i32_0 = arith.constant 0 : i32
    %c0_i32_1 = arith.constant 0 : i32
    return %c0_i32, %c0_i32_0 : i32, i32
  }
  func.func @transform_9(%arg0: i32) -> (i32, i32, i32, i32) {
    %c0_i32 = arith.constant 0 : i32
    %c0_i32_0 = arith.constant 0 : i32
    %c0_i32_1 = arith.constant 0 : i32
    %c0_i32_2 = arith.constant 0 : i32
    return %arg0, %c0_i32, %c0_i32_0, %c0_i32_1 : i32, i32, i32, i32
  }
}

</mosaic_0001>

<llo_original>
// kernel: tpu_custom_call.1
$region0: #{tpu_custom_call.1}
  #allocation0 [shape = 'u32[]', space=smem, size = 0x4, offset = 0x4, fixed_abs, tag = 'smem constant byte address 0x4 - core index']
  #allocation1 [shape = 'u32[144,128]{1,0:T(1,128)}', space=vmem, size = 0x12000, scoped, tag = 'internal scratch']
  #allocation2 [shape = 'f32[73,640]{1,0:T(8,128)}', space=vmem, size = 0x32000, scoped, tag = 'scratch operand']
  %s0 = inlined_call_operand.hbm [shape: bf16[2,64,32], index: 0, kind: input, shape index: {}]
  %s1 = inlined_call_operand.hbm [shape: f32[64,1], index: 1, kind: input, shape index: {}]
  %s2 = inlined_call_operand.hbm [shape: bf16[32,128], index: 2, kind: input, shape index: {}]
  %s3 = inlined_call_operand.hbm [shape: f32[1,128], index: 3, kind: input, shape index: {}]
  %s4 = inlined_call_operand.hbm [shape: bf16[128,512], index: 4, kind: input, shape index: {}]
  %s5 = inlined_call_operand.hbm [shape: bf16[128,640], index: 5, kind: input, shape index: {}]
  %s6 = inlined_call_operand.hbm [shape: f32[1,128], index: 6, kind: input, shape index: {}]
  %s7 = inlined_call_operand.hbm [shape: bf16[128,128], index: 7, kind: input, shape index: {}]
  %s8 = inlined_call_operand.hbm [shape: f32[1,128], index: 8, kind: input, shape index: {}]
  %s9 = inlined_call_operand.hbm [shape: bf16[2,4,64,128], index: 9, kind: output, shape index: {}]
  %s10 = sld [smem:[#allocation0]]
  $region105: #{tpu_custom_call.1} parent=0
    _
  %s12 = ssub.s32 1, %s10
  %s13 = scalar_select 0, %s12, %s10
  $region1: #{tpu_custom_call.1} parent=0
    #allocation3 [shape = 'u8[32768]{0}', space=vmem, size = 0x8000, scoped, tag = 'input window, operand 0']
    #allocation4 [shape = 's32[2]{0}', space=sflag, size = 0x8, scoped, tag = 'scoped memory for tpu_custom_call.1']
    #allocation5 [shape = 's32[2]{0}', space=sflag, size = 0x8, scoped, tag = 'scoped memory for tpu_custom_call.1']
    #allocation6 [shape = 'u8[32768]{0}', space=vmem, size = 0x8000, scoped, tag = 'input window, operand 1, single buffered']
    #allocation7 [shape = 's32[1]{0}', space=sflag, size = 0x4, scoped, tag = 'scoped memory for tpu_custom_call.1']
    #allocation8 [shape = 'u8[8192]{0}', space=vmem, size = 0x2000, scoped, tag = 'input window, operand 2, single buffered']
    #allocation9 [shape = 'u8[512]{0}', space=vmem, size = 0x400, scoped, tag = 'input window, operand 3, single buffered']
    #allocation10 [shape = 's32[1]{0}', space=sflag, size = 0x4, scoped, tag = 'scoped memory for tpu_custom_call.1']
    #allocation11 [shape = 'u8[131072]{0}', space=vmem, size = 0x20000, scoped, tag = 'input window, operand 4, single buffered']
    #allocation12 [shape = 'u8[163840]{0}', space=vmem, size = 0x28000, scoped, tag = 'input window, operand 5, single buffered']
    #allocation13 [shape = 's32[1]{0}', space=sflag, size = 0x4, scoped, tag = 'scoped memory for tpu_custom_call.1']
    #allocation14 [shape = 'u8[512]{0}', space=vmem, size = 0x400, scoped, tag = 'input window, operand 6, single buffered']
    #allocation15 [shape = 'u8[32768]{0}', space=vmem, size = 0x8000, scoped, tag = 'input window, operand 7, single buffered']
    #allocation16 [shape = 's32[1]{0}', space=sflag, size = 0x4, scoped, tag = 'scoped memory for tpu_custom_call.1']
    #allocation17 [shape = 'u8[512]{0}', space=vmem, size = 0x400, scoped, tag = 'input window, operand 8, single buffered']
    #allocation18 [shape = 'u8[131072]{0}', space=vmem, size = 0x20000, scoped, tag = 'output window, operand 0']
    %14 = vsyncpa [#allocation4], 0
    %s15 = scalar_lea.sflag [#allocation4], 1
    %16 = vsyncpa %s15, 0
    %17 = vsyncpa [#allocation7], 0
    %18 = vsyncpa [#allocation10], 0
    %19 = vsyncpa [#allocation13], 0
    %20 = vsyncpa [#allocation16], 0
    %21 = vsyncpa [#allocation5], 0
    %s22 = scalar_lea.sflag [#allocation5], 1
    %23 = vsyncpa %s22, 0
    loop: start=0, step=1, limit=4
    $region2: #{tpu_custom_call.1} parent=1 // loop_pre_header
      _
    $region3: #{tpu_custom_call.1} parent=1 // loop_header
      %s25 = sphi 0, %s29
      %p26 = scmp.ge.s32.totalorder %s25, 4
      %s35 = sphi 0, %s37
      %s38 = sphi 0, %s35
      %s39 = sphi 0, %s38
      %s55 = sphi 0, %s39
      %s59 = sphi 0, %s59
      %s61 = sphi 0, %s59
      %s62 = sphi 0, %s61
      %s76 = sphi 0, %s62
      %s80 = sphi 0, %s80
      %s82 = sphi 0, %s80
      %s83 = sphi 0, %s82
      %s97 = sphi 0, %s83
      %s101 = sphi 0, %s101
      %s103 = sphi 0, %s101
      %s104 = sphi 0, %s103
      %s118 = sphi 0, %s104
      %s122 = sphi 0, %s122
      %s124 = sphi 0, %s122
      %s125 = sphi 0, %s124
      %s139 = sphi 0, %s125
      %s143 = sphi 0, %s143
      %s145 = sphi 0, %s143
      %s146 = sphi 0, %s145
      %s160 = sphi 0, %s146
      %s164 = sphi 0, %s164
      %s166 = sphi 0, %s164
      %s167 = sphi 0, %s166
      %s181 = sphi 0, %s167
      %s185 = sphi 0, %s185
      %s187 = sphi 0, %s185
      %s188 = sphi 0, %s187
      %s202 = sphi 0, %s188
      %s206 = sphi 0, %s206
      %s208 = sphi 0, %s206
      %s209 = sphi 0, %s208
      %s223 = sphi 0, %s209
      %s229 = sphi 0, %s231
      %s232 = sphi 0, %s229
      %s233 = sphi 0, %s232
      %s249 = sphi 0, %s233
    $region4: #{tpu_custom_call.1} parent=1 // loop_header_branch
      %28 = sbr.rel (%p26) target = $region8
    $region5: #{tpu_custom_call.1} parent=1 // loop_body
      %s30 = ssub.s32 %s25, 1
      %s31 = ssub.s32 %s25, 2
      %s32 = sadd.s32 %s25, 1
      %s33 = ssub.s32 %s25, %s32
      %p34 = scmp.eq.s32.totalorder %s33, 0
      %s36 = sadd.s32 %s35, 1
      %s37 = scalar_select %p34, %s35, %s36
      %p40 = pneg %p34
      %p41 = scmp.eq.s32.totalorder %s25, 1
      %p42 = por %p40, %p41
      %p43 = scmp.ne.s32.totalorder %s35, %s38
      %p44 = scmp.eq.s32.totalorder %s25, 0
      %p45 = por %p43, %p44
      %p46 = scmp.ne.s32.totalorder %s35, %s38
      %p47 = scmp.eq.s32.totalorder %s30, 1
      %p48 = por %p46, %p47
      %p49 = scmp.ne.s32.totalorder %s38, %s39
      %p50 = scmp.eq.s32.totalorder %s30, 0
      %p51 = por %p49, %p50
      %p52 = scmp.ne.s32.totalorder %s38, %s39
      %p53 = scmp.eq.s32.totalorder %s31, 1
      %p54 = por %p52, %p53
      %p56 = scmp.ne.s32.totalorder %s39, %s55
      %p57 = scmp.eq.s32.totalorder %s31, 0
      %p58 = por %p56, %p57
      %s60 = sadd.s32 %s59, 1
      %p63 = scmp.eq.s32.totalorder %s25, 1
      %p64 = scmp.ne.s32.totalorder %s59, %s61
      %p65 = scmp.eq.s32.totalorder %s25, 0
      %p66 = por %p64, %p65
      %p67 = scmp.ne.s32.totalorder %s59, %s61
      %p68 = scmp.eq.s32.totalorder %s30, 1
      %p69 = por %p67, %p68
      %p70 = scmp.ne.s32.totalorder %s61, %s62
      %p71 = scmp.eq.s32.totalorder %s30, 0
      %p72 = por %p70, %p71
      %p73 = scmp.ne.s32.totalorder %s61, %s62
      %p74 = scmp.eq.s32.totalorder %s31, 1
      %p75 = por %p73, %p74
      %p77 = scmp.ne.s32.totalorder %s62, %s76
      %p78 = scmp.eq.s32.totalorder %s31, 0
      %p79 = por %p77, %p78
      %s81 = sadd.s32 %s80, 1
      %p84 = scmp.eq.s32.totalorder %s25, 1
      %p85 = scmp.ne.s32.totalorder %s80, %s82
      %p86 = scmp.eq.s32.totalorder %s25, 0
      %p87 = por %p85, %p86
      %p88 = scmp.ne.s32.totalorder %s80, %s82
      %p89 = scmp.eq.s32.totalorder %s30, 1
      %p90 = por %p88, %p89
      %p91 = scmp.ne.s32.totalorder %s82, %s83
      %p92 = scmp.eq.s32.totalorder %s30, 0
      %p93 = por %p91, %p92
      %p94 = scmp.ne.s32.totalorder %s82, %s83
      %p95 = scmp.eq.s32.totalorder %s31, 1
      %p96 = por %p94, %p95
      %p98 = scmp.ne.s32.totalorder %s83, %s97
      %p99 = scmp.eq.s32.totalorder %s31, 0
      %p100 = por %p98, %p99
      %s102 = sadd.s32 %s101, 1
      %p105 = scmp.eq.s32.totalorder %s25, 1
      %p106 = scmp.ne.s32.totalorder %s101, %s103
      %p107 = scmp.eq.s32.totalorder %s25, 0
      %p108 = por %p106, %p107
      %p109 = scmp.ne.s32.totalorder %s101, %s103
      %p110 = scmp.eq.s32.totalorder %s30, 1
      %p111 = por %p109, %p110
      %p112 = scmp.ne.s32.totalorder %s103, %s104
      %p113 = scmp.eq.s32.totalorder %s30, 0
      %p114 = por %p112, %p113
      %p115 = scmp.ne.s32.totalorder %s103, %s104
      %p116 = scmp.eq.s32.totalorder %s31, 1
      %p117 = por %p115, %p116
      %p119 = scmp.ne.s32.totalorder %s104, %s118
      %p120 = scmp.eq.s32.totalorder %s31, 0
      %p121 = por %p119, %p120
      %s123 = sadd.s32 %s122, 1
      %p126 = scmp.eq.s32.totalorder %s25, 1
      %p127 = scmp.ne.s32.totalorder %s122, %s124
      %p128 = scmp.eq.s32.totalorder %s25, 0
      %p129 = por %p127, %p128
      %p130 = scmp.ne.s32.totalorder %s122, %s124
      %p131 = scmp.eq.s32.totalorder %s30, 1
      %p132 = por %p130, %p131
      %p133 = scmp.ne.s32.totalorder %s124, %s125
      %p134 = scmp.eq.s32.totalorder %s30, 0
      %p135 = por %p133, %p134
      %p136 = scmp.ne.s32.totalorder %s124, %s125
      %p137 = scmp.eq.s32.totalorder %s31, 1
      %p138 = por %p136, %p137
      %p140 = scmp.ne.s32.totalorder %s125, %s139
      %p141 = scmp.eq.s32.totalorder %s31, 0
      %p142 = por %p140, %p141
      %s144 = sadd.s32 %s143, 1
      %p147 = scmp.eq.s32.totalorder %s25, 1
      %p148 = scmp.ne.s32.totalorder %s143, %s145
      %p149 = scmp.eq.s32.totalorder %s25, 0
      %p150 = por %p148, %p149
      %p151 = scmp.ne.s32.totalorder %s143, %s145
      %p152 = scmp.eq.s32.totalorder %s30, 1
      %p153 = por %p151, %p152
      %p154 = scmp.ne.s32.totalorder %s145, %s146
      %p155 = scmp.eq.s32.totalorder %s30, 0
      %p156 = por %p154, %p155
      %p157 = scmp.ne.s32.totalorder %s145, %s146
      %p158 = scmp.eq.s32.totalorder %s31, 1
      %p159 = por %p157, %p158
      %p161 = scmp.ne.s32.totalorder %s146, %s160
      %p162 = scmp.eq.s32.totalorder %s31, 0
      %p163 = por %p161, %p162
      %s165 = sadd.s32 %s164, 1
      %p168 = scmp.eq.s32.totalorder %s25, 1
      %p169 = scmp.ne.s32.totalorder %s164, %s166
      %p170 = scmp.eq.s32.totalorder %s25, 0
      %p171 = por %p169, %p170
      %p172 = scmp.ne.s32.totalorder %s164, %s166
      %p173 = scmp.eq.s32.totalorder %s30, 1
      %p174 = por %p172, %p173
      %p175 = scmp.ne.s32.totalorder %s166, %s167
      %p176 = scmp.eq.s32.totalorder %s30, 0
      %p177 = por %p175, %p176
      %p178 = scmp.ne.s32.totalorder %s166, %s167
      %p179 = scmp.eq.s32.totalorder %s31, 1
      %p180 = por %p178, %p179
      %p182 = scmp.ne.s32.totalorder %s167, %s181
      %p183 = scmp.eq.s32.totalorder %s31, 0
      %p184 = por %p182, %p183
      %s186 = sadd.s32 %s185, 1
      %p189 = scmp.eq.s32.totalorder %s25, 1
      %p190 = scmp.ne.s32.totalorder %s185, %s187
      %p191 = scmp.eq.s32.totalorder %s25, 0
      %p192 = por %p190, %p191
      %p193 = scmp.ne.s32.totalorder %s185, %s187
      %p194 = scmp.eq.s32.totalorder %s30, 1
      %p195 = por %p193, %p194
      %p196 = scmp.ne.s32.totalorder %s187, %s188
      %p197 = scmp.eq.s32.totalorder %s30, 0
      %p198 = por %p196, %p197
      %p199 = scmp.ne.s32.totalorder %s187, %s188
      %p200 = scmp.eq.s32.totalorder %s31, 1
      %p201 = por %p199, %p200
      %p203 = scmp.ne.s32.totalorder %s188, %s202
      %p204 = scmp.eq.s32.totalorder %s31, 0
      %p205 = por %p203, %p204
      %s207 = sadd.s32 %s206, 1
      %p210 = scmp.eq.s32.totalorder %s25, 1
      %p211 = scmp.ne.s32.totalorder %s206, %s208
      %p212 = scmp.eq.s32.totalorder %s25, 0
      %p213 = por %p211, %p212
      %p214 = scmp.ne.s32.totalorder %s206, %s208
      %p215 = scmp.eq.s32.totalorder %s30, 1
      %p216 = por %p214, %p215
      %p217 = scmp.ne.s32.totalorder %s208, %s209
      %p218 = scmp.eq.s32.totalorder %s30, 0
      %p219 = por %p217, %p218
      %p220 = scmp.ne.s32.totalorder %s208, %s209
      %p221 = scmp.eq.s32.totalorder %s31, 1
      %p222 = por %p220, %p221
      %p224 = scmp.ne.s32.totalorder %s209, %s223
      %p225 = scmp.eq.s32.totalorder %s31, 0
      %p226 = por %p224, %p225
      %s227 = ssub.s32 %s25, %s32
      %p228 = scmp.eq.s32.totalorder %s227, 0
      %s230 = sadd.s32 %s229, 1
      %s231 = scalar_select %p228, %s229, %s230
      %p234 = pneg %p228
      %p235 = scmp.eq.s32.totalorder %s25, 1
      %p236 = por %p234, %p235
      %p237 = scmp.ne.s32.totalorder %s229, %s232
      %p238 = scmp.eq.s32.totalorder %s25, 0
      %p239 = por %p237, %p238
      %p240 = scmp.ne.s32.totalorder %s229, %s232
      %p241 = scmp.eq.s32.totalorder %s30, 1
      %p242 = por %p240, %p241
      %p243 = scmp.ne.s32.totalorder %s232, %s233
      %p244 = scmp.eq.s32.totalorder %s30, 0
      %p245 = por %p243, %p244
      %p246 = scmp.ne.s32.totalorder %s232, %s233
      %p247 = scmp.eq.s32.totalorder %s31, 1
      %p248 = por %p246, %p247
      %p250 = scmp.ne.s32.totalorder %s233, %s249
      %p251 = scmp.eq.s32.totalorder %s31, 0
      %p252 = por %p250, %p251
      %p253 = scmp.le.s32.totalorder 1, %s25
      %p254 = scmp.lt.s32.totalorder %s25, 3
      %p255 = pnand %p253, %p254
      %p256 = pneg %p255
      // Predicated region
      $region9: #{tpu_custom_call.1} parent=5 // pred_check
        _
      $region10: #{tpu_custom_call.1} parent=5 // pred_check_branch
        %258 = sbr.rel (%p255) target = $region12
      $region11: #{tpu_custom_call.1} parent=5 // pred_region
        %s259 = ssub.s32 %s25, 1
        // Predicated region
        $region13: #{tpu_custom_call.1} parent=11 // pred_check
          %p260 = pneg %p72
        $region14: #{tpu_custom_call.1} parent=11 // pred_check_branch
          %262 = sbr.rel (%p260) target = $region16
        $region15: #{tpu_custom_call.1} parent=11 // pred_region
          %s264 = ssub.s32 1024, 1024
          %265 = vsyncadd [#allocation7], %s264
          %s266 = sshll.u32 [#allocation6], 4
          %s267 = int_to_ptr.vmem [resolvable:$true] %s266
          %272 = dma.hbm_to_vmem [thread:$0]  %s1, 1024, %s267, [#allocation7], 128, 128, 8
        $region16: #{tpu_custom_call.1} parent=11 // pred_fallthru
          _
        // Predicated region
        $region17: #{tpu_custom_call.1} parent=11 // pred_check
          %p273 = pneg %p93
        $region18: #{tpu_custom_call.1} parent=11 // pred_check_branch
          %275 = sbr.rel (%p273) target = $region20
        $region19: #{tpu_custom_call.1} parent=11 // pred_region
          %s277 = ssub.s32 256, 256
          %278 = vsyncadd [#allocation7], %s277
          %s279 = sshll.u32 [#allocation8], 4
          %s280 = int_to_ptr.vmem [resolvable:$true] %s279
          %285 = dma.hbm_to_vmem [thread:$0]  %s2, 256, %s280, [#allocation7], 64, 64, 4
        $region20: #{tpu_custom_call.1} parent=11 // pred_fallthru
          _
        // Predicated region
        $region21: #{tpu_custom_call.1} parent=11 // pred_check
          %p286 = pneg %p114
        $region22: #{tpu_custom_call.1} parent=11 // pred_check_branch
          %288 = sbr.rel (%p286) target = $region24
        $region23: #{tpu_custom_call.1} parent=11 // pred_region
          %s290 = ssub.s32 16, 16
          %291 = vsyncadd [#allocation10], %s290
          %s293 = sshll.u32 [#allocation9], 4
          %s294 = int_to_ptr.vmem [resolvable:$true] %s293
          %296 = dma.hbm_to_vmem [thread:$0]  %s3, 16, %s294, [#allocation10]
        $region24: #{tpu_custom_call.1} parent=11 // pred_fallthru
          _
        // Predicated region
        $region25: #{tpu_custom_call.1} parent=11 // pred_check
          %p297 = pneg %p135
        $region26: #{tpu_custom_call.1} parent=11 // pred_check_branch
          %299 = sbr.rel (%p297) target = $region28
        $region27: #{tpu_custom_call.1} parent=11 // pred_region
          %s301 = ssub.s32 4096, 4096
          %302 = vsyncadd [#allocation10], %s301
          %s303 = sshll.u32 [#allocation11], 4
          %s304 = int_to_ptr.vmem [resolvable:$true] %s303
          %309 = dma.hbm_to_vmem [thread:$0]  %s4, 4096, %s304, [#allocation10], 256, 256, 16
        $region28: #{tpu_custom_call.1} parent=11 // pred_fallthru
          _
        // Predicated region
        $region29: #{tpu_custom_call.1} parent=11 // pred_check
          %p310 = pneg %p156
        $region30: #{tpu_custom_call.1} parent=11 // pred_check_branch
          %312 = sbr.rel (%p310) target = $region32
        $region31: #{tpu_custom_call.1} parent=11 // pred_region
          %s314 = ssub.s32 5120, 5120
          %315 = vsyncadd [#allocation13], %s314
          %s316 = sshll.u32 [#allocation12], 4
          %s317 = int_to_ptr.vmem [resolvable:$true] %s316
          %322 = dma.hbm_to_vmem [thread:$0]  %s5, 5120, %s317, [#allocation13], 320, 320, 20
        $region32: #{tpu_custom_call.1} parent=11 // pred_fallthru
          _
        // Predicated region
        $region33: #{tpu_custom_call.1} parent=11 // pred_check
          %p323 = pneg %p177
        $region34: #{tpu_custom_call.1} parent=11 // pred_check_branch
          %325 = sbr.rel (%p323) target = $region36
        $region35: #{tpu_custom_call.1} parent=11 // pred_region
          %s327 = ssub.s32 16, 16
          %328 = vsyncadd [#allocation13], %s327
          %s330 = sshll.u32 [#allocation14], 4
          %s331 = int_to_ptr.vmem [resolvable:$true] %s330
          %333 = dma.hbm_to_vmem [thread:$0]  %s6, 16, %s331, [#allocation13]
        $region36: #{tpu_custom_call.1} parent=11 // pred_fallthru
          _
        // Predicated region
        $region37: #{tpu_custom_call.1} parent=11 // pred_check
          %p334 = pneg %p198
        $region38: #{tpu_custom_call.1} parent=11 // pred_check_branch
          %336 = sbr.rel (%p334) target = $region40
        $region39: #{tpu_custom_call.1} parent=11 // pred_region
          %s338 = ssub.s32 1024, 1024
          %339 = vsyncadd [#allocation16], %s338
          %s340 = sshll.u32 [#allocation15], 4
          %s341 = int_to_ptr.vmem [resolvable:$true] %s340
          %346 = dma.hbm_to_vmem [thread:$0]  %s7, 1024, %s341, [#allocation16], 64, 64, 4
        $region40: #{tpu_custom_call.1} parent=11 // pred_fallthru
          _
        // Predicated region
        $region41: #{tpu_custom_call.1} parent=11 // pred_check
          %p347 = pneg %p219
        $region42: #{tpu_custom_call.1} parent=11 // pred_check_branch
          %349 = sbr.rel (%p347) target = $region44
        $region43: #{tpu_custom_call.1} parent=11 // pred_region
          %s351 = ssub.s32 16, 16
          %352 = vsyncadd [#allocation16], %s351
          %s354 = sshll.u32 [#allocation17], 4
          %s355 = int_to_ptr.vmem [resolvable:$true] %s354
          %357 = dma.hbm_to_vmem [thread:$0]  %s8, 16, %s355, [#allocation16]
        $region44: #{tpu_custom_call.1} parent=11 // pred_fallthru
          _
      $region12: #{tpu_custom_call.1} parent=5 // pred_fallthru
        _
      %p358 = scmp.lt.s32.totalorder %s25, 2
      // Predicated region
      $region45: #{tpu_custom_call.1} parent=5 // pred_check
        %p359 = pneg %p358
      $region46: #{tpu_custom_call.1} parent=5 // pred_check_branch
        %361 = sbr.rel (%p359) target = $region48
      $region47: #{tpu_custom_call.1} parent=5 // pred_region
        // Predicated region
        $region49: #{tpu_custom_call.1} parent=47 // pred_check
          %p362 = pneg %p45
        $region50: #{tpu_custom_call.1} parent=47 // pred_check_branch
          %364 = sbr.rel (%p362) target = $region52
        $region51: #{tpu_custom_call.1} parent=47 // pred_region
          %s365 = sand.u32 %s35, 1
          %s366 = scalar_lea.sflag [#allocation4], %s365
          %s367 = sand.u32 %s35, 1
          %s368 = smul.addr %s367, 32
          %s369 = scalar_lea.vmem [#allocation3], %s368
          %s371 = ssub.s32 512, 512
          %372 = vsyncadd %s366, %s371
          %s373 = smul.addr %s25, 8
          %s374 = smul.addr %s373, 64
          %s375 = scalar_lea.hbm %s0, %s374
          %s376 = sshll.u32 %s369, 4
          %s377 = int_to_ptr.vmem [resolvable:$true] %s376
          %382 = dma.hbm_to_vmem [thread:$0]  %s375, 512, %s377, %s366, 64, 64, 4
        $region52: #{tpu_custom_call.1} parent=47 // pred_fallthru
          _
      $region48: #{tpu_custom_call.1} parent=5 // pred_fallthru
        _
      %p383 = scmp.le.s32.totalorder 1, %s25
      %p384 = scmp.lt.s32.totalorder %s25, 3
      %p385 = pnand %p383, %p384
      %p386 = pneg %p385
      // Predicated region
      $region53: #{tpu_custom_call.1} parent=5 // pred_check
        _
      $region54: #{tpu_custom_call.1} parent=5 // pred_check_branch
        %388 = sbr.rel (%p385) target = $region56
      $region55: #{tpu_custom_call.1} parent=5 // pred_region
        %s389 = ssub.s32 %s25, 1
        %s390 = sand.u32 %s38, 1
        %s391 = scalar_lea.sflag [#allocation4], %s390
        %s392 = sand.u32 %s38, 1
        %s393 = smul.addr %s392, 32
        %s394 = scalar_lea.vmem [#allocation3], %s393
        // Predicated region
        $region57: #{tpu_custom_call.1} parent=55 // pred_check
          %p395 = pneg %p51
        $region58: #{tpu_custom_call.1} parent=55 // pred_check_branch
          %397 = sbr.rel (%p395) target = $region60
        $region59: #{tpu_custom_call.1} parent=55 // pred_region
          %398 = dma.done %s391, 512
        $region60: #{tpu_custom_call.1} parent=55 // pred_fallthru
          _
        // Predicated region
        $region61: #{tpu_custom_call.1} parent=55 // pred_check
          %p399 = pneg %p72
        $region62: #{tpu_custom_call.1} parent=55 // pred_check_branch
          %401 = sbr.rel (%p399) target = $region64
        $region63: #{tpu_custom_call.1} parent=55 // pred_region
          %402 = dma.done [#allocation7], 1024
        $region64: #{tpu_custom_call.1} parent=55 // pred_fallthru
          _
        // Predicated region
        $region65: #{tpu_custom_call.1} parent=55 // pred_check
          %p403 = pneg %p93
        $region66: #{tpu_custom_call.1} parent=55 // pred_check_branch
          %405 = sbr.rel (%p403) target = $region68
        $region67: #{tpu_custom_call.1} parent=55 // pred_region
          %406 = dma.done [#allocation7], 256
        $region68: #{tpu_custom_call.1} parent=55 // pred_fallthru
          _
        // Predicated region
        $region69: #{tpu_custom_call.1} parent=55 // pred_check
          %p407 = pneg %p114
        $region70: #{tpu_custom_call.1} parent=55 // pred_check_branch
          %409 = sbr.rel (%p407) target = $region72
        $region71: #{tpu_custom_call.1} parent=55 // pred_region
          %410 = dma.done [#allocation10], 16
        $region72: #{tpu_custom_call.1} parent=55 // pred_fallthru
          _
        // Predicated region
        $region73: #{tpu_custom_call.1} parent=55 // pred_check
          %p411 = pneg %p135
        $region74: #{tpu_custom_call.1} parent=55 // pred_check_branch
          %413 = sbr.rel (%p411) target = $region76
        $region75: #{tpu_custom_call.1} parent=55 // pred_region
          %414 = dma.done [#allocation10], 4096
        $region76: #{tpu_custom_call.1} parent=55 // pred_fallthru
          _
        // Predicated region
        $region77: #{tpu_custom_call.1} parent=55 // pred_check
          %p415 = pneg %p156
        $region78: #{tpu_custom_call.1} parent=55 // pred_check_branch
          %417 = sbr.rel (%p415) target = $region80
        $region79: #{tpu_custom_call.1} parent=55 // pred_region
          %418 = dma.done [#allocation13], 5120
        $region80: #{tpu_custom_call.1} parent=55 // pred_fallthru
          _
        // Predicated region
        $region81: #{tpu_custom_call.1} parent=55 // pred_check
          %p419 = pneg %p177
        $region82: #{tpu_custom_call.1} parent=55 // pred_check_branch
          %421 = sbr.rel (%p419) target = $region84
        $region83: #{tpu_custom_call.1} parent=55 // pred_region
          %422 = dma.done [#allocation13], 16
        $region84: #{tpu_custom_call.1} parent=55 // pred_fallthru
          _
        // Predicated region
        $region85: #{tpu_custom_call.1} parent=55 // pred_check
          %p423 = pneg %p198
        $region86: #{tpu_custom_call.1} parent=55 // pred_check_branch
          %425 = sbr.rel (%p423) target = $region88
        $region87: #{tpu_custom_call.1} parent=55 // pred_region
          %426 = dma.done [#allocation16], 1024
        $region88: #{tpu_custom_call.1} parent=55 // pred_fallthru
          _
        // Predicated region
        $region89: #{tpu_custom_call.1} parent=55 // pred_check
          %p427 = pneg %p219
        $region90: #{tpu_custom_call.1} parent=55 // pred_check_branch
          %429 = sbr.rel (%p427) target = $region92
        $region91: #{tpu_custom_call.1} parent=55 // pred_region
          %430 = dma.done [#allocation16], 16
        $region92: #{tpu_custom_call.1} parent=55 // pred_fallthru
          _
        %s431 = sand.u32 %s38, 1
        %s432 = scalar_lea.sflag [#allocation4], %s431
        %s433 = sand.u32 %s38, 1
        %s434 = smul.addr %s433, 32
        %s435 = scalar_lea.vmem [#allocation3], %s434
        %p436 = pneg %p51
        %p437 = pneg %p48
        %p438 = pneg %p72
        %p439 = pneg %p69
        %p440 = pneg %p93
        %p441 = pneg %p90
        %p442 = pneg %p114
        %p443 = pneg %p111
        %p444 = pneg %p135
        %p445 = pneg %p132
        %p446 = pneg %p156
        %p447 = pneg %p153
        %p448 = pneg %p177
        %p449 = pneg %p174
        %p450 = pneg %p198
        %p451 = pneg %p195
        %p452 = pneg %p219
        %p453 = pneg %p216
        %p454 = pneg %p245
        %p455 = pneg %p242
        %s456 = sand.u32 %s232, 1
        %s457 = scalar_lea.sflag [#allocation5], %s456
        %s458 = sand.u32 %s232, 1
        %s459 = smul.addr %s458, 128
        %s460 = scalar_lea.vmem [#allocation18], %s459
        %v462 = vld [vmem:[%s394] sm:$0xf]
        %v463 = vld [vmem:[%s394 + $0x4] sm:$0xf]
        %v464 = vld [vmem:[%s394 + $0x8] sm:$0xf]
        %v465 = vld [vmem:[%s394 + $0xc] sm:$0xf]
        %v466 = vld [vmem:[%s394 + $0x10] sm:$0xf]
        %v467 = vld [vmem:[%s394 + $0x14] sm:$0xf]
        %v468 = vld [vmem:[%s394 + $0x18] sm:$0xf]
        %v469 = vld [vmem:[%s394 + $0x1c] sm:$0xf]
        %v470 = vld [vmem:[#allocation8] sm:$0xf]
        %v471 = vld [vmem:[#allocation8 + $0x4] sm:$0xf]
        %v472 = vld [vmem:[#allocation8 + $0x8] sm:$0xf]
        %v473 = vld [vmem:[#allocation8 + $0xc] sm:$0xf]
        %v474 = vld [vmem:[#allocation9] sm:$0x1]
        %v476 = vlaneseq
        %v477 = vshrl.u32 %v476, 7
        %v478 = vsub.s32 0, %v477
        %v479 = vrot.slane %v474, %v478
        %v489 = vunpack.c.l.b16 %v462
        %v490 = vunpack.c.l.b16 %v463
        %v491 = vunpack.c.l.b16 %v464
        %v492 = vunpack.c.l.b16 %v465
        %v493 = vunpack.c.l.b16 %v466
        %v494 = vunpack.c.l.b16 %v467
        %v495 = vunpack.c.l.b16 %v468
        %v496 = vunpack.c.l.b16 %v469
        %v497 = vpack.c.b16 %v490, %v489
        %v498 = vpack.c.b16 %v492, %v491
        %v499 = vpack.c.b16 %v494, %v493
        %v500 = vpack.c.b16 %v496, %v495
        %v505 = vunpack.c.l.b16 %v470
        %v506 = vunpack.c.l.b16 %v471
        %v507 = vunpack.c.l.b16 %v472
        %v508 = vunpack.c.l.b16 %v473
        %v509 = vpack.c.b16 %v506, %v505
        %v510 = vpack.c.b16 %v508, %v507
        %vm513 = vcmask 261120
        %v515 = vsel %vm513, %v497, 0
        %v518 = vsel %vm513, %v498, 0
        %v521 = vsel %vm513, %v499, 0
        %v524 = vsel %vm513, %v500, 0
        %526 = vmatprep.subr.bf16.mxu0 0
        %527 = vmatpush1.bf16.msra.mxu0 %v509
        %528 = vmatprep.subr.bf16.mxu0 0
        %529 = vmatpush1.bf16.msra.mxu0 %v510
        %530 = vmatprep.subr.bf16.mxu0 0
        %531 = vmatpush1.bf16.msra.mxu0 0
        %532 = vmatprep.subr.bf16.mxu0 0
        %533 = vmatpush1.bf16.msra.mxu0 0
        %534 = vmatprep.subr.bf16.mxu0 0
        %535 = vmatpush1.bf16.msra.mxu0 0
        %536 = vmatprep.subr.bf16.mxu0 0
        %537 = vmatpush1.bf16.msra.mxu0 0
        %538 = vmatprep.subr.bf16.mxu0 0
        %539 = vmatpush1.bf16.msra.mxu0 0
        %540 = vmatprep.subr.bf16.mxu0 0
        %541 = vmatpush1.bf16.msra.mxu0 0
        %542 = vmatprep.subr.bf16.mxu0 0
        %543 = vmatpush1.bf16.msra.mxu0 0
        %544 = vmatprep.subr.bf16.mxu0 0
        %545 = vmatpush1.bf16.msra.mxu0 0
        %546 = vmatprep.subr.bf16.mxu0 0
        %547 = vmatpush1.bf16.msra.mxu0 0
        %548 = vmatprep.subr.bf16.mxu0 0
        %549 = vmatpush1.bf16.msra.mxu0 0
        %550 = vmatprep.subr.bf16.mxu0 0
        %551 = vmatpush1.bf16.msra.mxu0 0
        %552 = vmatprep.subr.bf16.mxu0 0
        %553 = vmatpush1.bf16.msra.mxu0 0
        %554 = vmatprep.subr.bf16.mxu0 0
        %555 = vmatpush1.bf16.msra.mxu0 0
        %556 = vmatprep.subr.bf16.mxu0 0
        %557 = vmatpush1.bf16.msra.mxu0 0
        %558 = vmatprep.mubr.bf16.mxu0 0
        %559 = vmatmul.mubr.bf16.gmra.mrb[0].mxu0 %v515
        %v560 = vpop.f32.mrb[0].mxu0
        %v561 = vadd.f32 %v479, %v560
        %v562 = vpop.f32.mrb[0].mxu0
        %v563 = vpop.f32.mrb[0].mxu0
        %v564 = vadd.f32 %v479, %v563
        %v565 = vpop.f32.mrb[0].mxu0
        %566 = vmatprep.mubr.bf16.mxu0 0
        %567 = vmatmul.mubr.bf16.gmra.mrb[0].mxu0 %v518
        %v568 = vpop.f32.mrb[0].mxu0
        %v569 = vadd.f32 %v479, %v568
        %v570 = vpop.f32.mrb[0].mxu0
        %v571 = vpop.f32.mrb[0].mxu0
        %v572 = vadd.f32 %v479, %v571
        %v573 = vpop.f32.mrb[0].mxu0
        %574 = vmatprep.mubr.bf16.mxu0 0
        %575 = vmatmul.mubr.bf16.gmra.mrb[0].mxu0 %v521
        %v576 = vpop.f32.mrb[0].mxu0
        %v577 = vadd.f32 %v479, %v576
        %v578 = vpop.f32.mrb[0].mxu0
        %v579 = vpop.f32.mrb[0].mxu0
        %v580 = vadd.f32 %v479, %v579
        %v581 = vpop.f32.mrb[0].mxu0
        %582 = vmatprep.mubr.bf16.mxu0 0
        %583 = vmatmul.mubr.bf16.gmra.mrb[0].mxu0 %v524
        %v584 = vpop.f32.mrb[0].mxu0
        %v585 = vadd.f32 %v479, %v584
        %v586 = vpop.f32.mrb[0].mxu0
        %v587 = vpop.f32.mrb[0].mxu0
        %v588 = vadd.f32 %v479, %v587
        %v589 = vpop.f32.mrb[0].mxu0
        %590 = vdwg.mxu0
        %v591 = vmax.f32 %v561, 0.0
        %v592 = vmax.f32 %v564, 0.0
        %v593 = vmax.f32 %v569, 0.0
        %v594 = vmax.f32 %v572, 0.0
        %v595 = vmax.f32 %v577, 0.0
        %v596 = vmax.f32 %v580, 0.0
        %v597 = vmax.f32 %v585, 0.0
        %v598 = vmax.f32 %v588, 0.0
        %v599 = vpack.c.bf16 %v592, %v591
        %v600 = vpack.c.bf16 %v594, %v593
        %v601 = vpack.c.bf16 %v596, %v595
        %v602 = vpack.c.bf16 %v598, %v597
        %v603 = vld [vmem:[#allocation11] sm:$0xff]
        %v604 = vld [vmem:[#allocation11 + $0x8] sm:$0xff]
        %v605 = vld [vmem:[#allocation11 + $0x10] sm:$0xff]
        %v606 = vld [vmem:[#allocation11 + $0x18] sm:$0xff]
        %v607 = vld [vmem:[#allocation11 + $0x20] sm:$0xff]
        %v608 = vld [vmem:[#allocation11 + $0x28] sm:$0xff]
        %v609 = vld [vmem:[#allocation11 + $0x30] sm:$0xff]
        %v610 = vld [vmem:[#allocation11 + $0x38] sm:$0xff]
        %v611 = vld [vmem:[#allocation11 + $0x40] sm:$0xff]
        %v612 = vld [vmem:[#allocation11 + $0x48] sm:$0xff]
        %v613 = vld [vmem:[#allocation11 + $0x50] sm:$0xff]
        %v614 = vld [vmem:[#allocation11 + $0x58] sm:$0xff]
        %v615 = vld [vmem:[#allocation11 + $0x60] sm:$0xff]
        %v616 = vld [vmem:[#allocation11 + $0x68] sm:$0xff]
        %v617 = vld [vmem:[#allocation11 + $0x70] sm:$0xff]
        %v618 = vld [vmem:[#allocation11 + $0x78] sm:$0xff]
        %v619 = vld [vmem:[#allocation11 + $0x80] sm:$0xff]
        %v620 = vld [vmem:[#allocation11 + $0x88] sm:$0xff]
        %v621 = vld [vmem:[#allocation11 + $0x90] sm:$0xff]
        %v622 = vld [vmem:[#allocation11 + $0x98] sm:$0xff]
        %v623 = vld [vmem:[#allocation11 + $0xa0] sm:$0xff]
        %v624 = vld [vmem:[#allocation11 + $0xa8] sm:$0xff]
        %v625 = vld [vmem:[#allocation11 + $0xb0] sm:$0xff]
        %v626 = vld [vmem:[#allocation11 + $0xb8] sm:$0xff]
        %v627 = vld [vmem:[#allocation11 + $0xc0] sm:$0xff]
        %v628 = vld [vmem:[#allocation11 + $0xc8] sm:$0xff]
        %v629 = vld [vmem:[#allocation11 + $0xd0] sm:$0xff]
        %v630 = vld [vmem:[#allocation11 + $0xd8] sm:$0xff]
        %v631 = vld [vmem:[#allocation11 + $0xe0] sm:$0xff]
        %v632 = vld [vmem:[#allocation11 + $0xe8] sm:$0xff]
        %v633 = vld [vmem:[#allocation11 + $0xf0] sm:$0xff]
        %v634 = vld [vmem:[#allocation11 + $0xf8] sm:$0xff]
        %v667 = vunpack.c.l.b16 %v603
        %v668 = vunpack.c.h.b16 %v603
        %v669 = vunpack.c.l.b16 %v604
        %v670 = vunpack.c.h.b16 %v604
        %v671 = vunpack.c.l.b16 %v605
        %v672 = vunpack.c.h.b16 %v605
        %v673 = vunpack.c.l.b16 %v606
        %v674 = vunpack.c.h.b16 %v606
        %v675 = vunpack.c.l.b16 %v607
        %v676 = vunpack.c.h.b16 %v607
        %v677 = vunpack.c.l.b16 %v608
        %v678 = vunpack.c.h.b16 %v608
        %v679 = vunpack.c.l.b16 %v609
        %v680 = vunpack.c.h.b16 %v609
        %v681 = vunpack.c.l.b16 %v610
        %v682 = vunpack.c.h.b16 %v610
        %v683 = vunpack.c.l.b16 %v611
        %v684 = vunpack.c.h.b16 %v611
        %v685 = vunpack.c.l.b16 %v612
        %v686 = vunpack.c.h.b16 %v612
        %v687 = vunpack.c.l.b16 %v613
        %v688 = vunpack.c.h.b16 %v613
        %v689 = vunpack.c.l.b16 %v614
        %v690 = vunpack.c.h.b16 %v614
        %v691 = vunpack.c.l.b16 %v615
        %v692 = vunpack.c.h.b16 %v615
        %v693 = vunpack.c.l.b16 %v616
        %v694 = vunpack.c.h.b16 %v616
        %v695 = vunpack.c.l.b16 %v617
        %v696 = vunpack.c.h.b16 %v617
        %v697 = vunpack.c.l.b16 %v618
        %v698 = vunpack.c.h.b16 %v618
        %v699 = vunpack.c.l.b16 %v619
        %v700 = vunpack.c.h.b16 %v619
        %v701 = vunpack.c.l.b16 %v620
        %v702 = vunpack.c.h.b16 %v620
        %v703 = vunpack.c.l.b16 %v621
        %v704 = vunpack.c.h.b16 %v621
        %v705 = vunpack.c.l.b16 %v622
        %v706 = vunpack.c.h.b16 %v622
        %v707 = vunpack.c.l.b16 %v623
        %v708 = vunpack.c.h.b16 %v623
        %v709 = vunpack.c.l.b16 %v624
        %v710 = vunpack.c.h.b16 %v624
        %v711 = vunpack.c.l.b16 %v625
        %v712 = vunpack.c.h.b16 %v625
        %v713 = vunpack.c.l.b16 %v626
        %v714 = vunpack.c.h.b16 %v626
        %v715 = vunpack.c.l.b16 %v627
        %v716 = vunpack.c.h.b16 %v627
        %v717 = vunpack.c.l.b16 %v628
        %v718 = vunpack.c.h.b16 %v628
        %v719 = vunpack.c.l.b16 %v629
        %v720 = vunpack.c.h.b16 %v629
        %v721 = vunpack.c.l.b16 %v630
        %v722 = vunpack.c.h.b16 %v630
        %v723 = vunpack.c.l.b16 %v631
        %v724 = vunpack.c.h.b16 %v631
        %v725 = vunpack.c.l.b16 %v632
        %v726 = vunpack.c.h.b16 %v632
        %v727 = vunpack.c.l.b16 %v633
        %v728 = vunpack.c.h.b16 %v633
        %v729 = vunpack.c.l.b16 %v634
        %v730 = vunpack.c.h.b16 %v634
        %v731 = vpack.c.b16 %v671, %v667
        %v732 = vpack.c.b16 %v672, %v668
        %v733 = vpack.c.b16 %v673, %v669
        %v734 = vpack.c.b16 %v674, %v670
        %v735 = vpack.c.b16 %v679, %v675
        %v736 = vpack.c.b16 %v680, %v676
        %v737 = vpack.c.b16 %v681, %v677
        %v738 = vpack.c.b16 %v682, %v678
        %v739 = vpack.c.b16 %v687, %v683
        %v740 = vpack.c.b16 %v688, %v684
        %v741 = vpack.c.b16 %v689, %v685
        %v742 = vpack.c.b16 %v690, %v686
        %v743 = vpack.c.b16 %v695, %v691
        %v744 = vpack.c.b16 %v696, %v692
        %v745 = vpack.c.b16 %v697, %v693
        %v746 = vpack.c.b16 %v698, %v694
        %v747 = vpack.c.b16 %v703, %v699
        %v748 = vpack.c.b16 %v704, %v700
        %v749 = vpack.c.b16 %v705, %v701
        %v750 = vpack.c.b16 %v706, %v702
        %v751 = vpack.c.b16 %v711, %v707
        %v752 = vpack.c.b16 %v712, %v708
        %v753 = vpack.c.b16 %v713, %v709
        %v754 = vpack.c.b16 %v714, %v710
        %v755 = vpack.c.b16 %v719, %v715
        %v756 = vpack.c.b16 %v720, %v716
        %v757 = vpack.c.b16 %v721, %v717
        %v758 = vpack.c.b16 %v722, %v718
        %v759 = vpack.c.b16 %v727, %v723
        %v760 = vpack.c.b16 %v728, %v724
        %v761 = vpack.c.b16 %v729, %v725
        %v762 = vpack.c.b16 %v730, %v726
        %795 = vmatprep.subr.bf16.mxu0 %v732
        %796 = vmatpush1.bf16.msra.mxu0 %v731
        %797 = vmatprep.subr.bf16.mxu0 %v736
        %798 = vmatpush1.bf16.msra.mxu0 %v735
        %799 = vmatprep.subr.bf16.mxu0 %v740
        %800 = vmatpush1.bf16.msra.mxu0 %v739
        %801 = vmatprep.subr.bf16.mxu0 %v744
        %802 = vmatpush1.bf16.msra.mxu0 %v743
        %803 = vmatprep.subr.bf16.mxu0 %v748
        %804 = vmatpush1.bf16.msra.mxu0 %v747
        %805 = vmatprep.subr.bf16.mxu0 %v752
        %806 = vmatpush1.bf16.msra.mxu0 %v751
        %807 = vmatprep.subr.bf16.mxu0 %v756
        %808 = vmatpush1.bf16.msra.mxu0 %v755
        %809 = vmatprep.subr.bf16.mxu0 %v760
        %810 = vmatpush1.bf16.msra.mxu0 %v759
        %811 = vmatprep.subr.bf16.mxu0 0
        %812 = vmatpush1.bf16.msra.mxu0 0
        %813 = vmatprep.subr.bf16.mxu0 0
        %814 = vmatpush1.bf16.msra.mxu0 0
        %815 = vmatprep.subr.bf16.mxu0 0
        %816 = vmatpush1.bf16.msra.mxu0 0
        %817 = vmatprep.subr.bf16.mxu0 0
        %818 = vmatpush1.bf16.msra.mxu0 0
        %819 = vmatprep.subr.bf16.mxu0 0
        %820 = vmatpush1.bf16.msra.mxu0 0
        %821 = vmatprep.subr.bf16.mxu0 0
        %822 = vmatpush1.bf16.msra.mxu0 0
        %823 = vmatprep.subr.bf16.mxu0 0
        %824 = vmatpush1.bf16.msra.mxu0 0
        %825 = vmatprep.subr.bf16.mxu0 0
        %826 = vmatpush1.bf16.msra.mxu0 0
        %827 = vmatprep.mubr.bf16.mxu0 0
        %828 = vmatmul.mubr.bf16.gmra.mrb[0].mxu0 %v599
        %v829 = vpop.f32.mrb[0].mxu0
        %v830 = vadd.f32 0.0, %v829
        %v831 = vpop.f32.mrb[0].mxu0
        %v832 = vadd.f32 0.0, %v831
        %v833 = vpop.f32.mrb[0].mxu0
        %v834 = vadd.f32 0.0, %v833
        %v835 = vpop.f32.mrb[0].mxu0
        %v836 = vadd.f32 0.0, %v835
        %837 = vmatprep.mubr.bf16.mxu0 0
        %838 = vmatmul.mubr.bf16.gmra.mrb[0].mxu0 %v600
        %v839 = vpop.f32.mrb[0].mxu0
        %v840 = vadd.f32 0.0, %v839
        %v841 = vpop.f32.mrb[0].mxu0
        %v842 = vadd.f32 0.0, %v841
        %v843 = vpop.f32.mrb[0].mxu0
        %v844 = vadd.f32 0.0, %v843
        %v845 = vpop.f32.mrb[0].mxu0
        %v846 = vadd.f32 0.0, %v845
        %847 = vmatprep.mubr.bf16.mxu0 0
        %848 = vmatmul.mubr.bf16.gmra.mrb[0].mxu0 %v601
        %v849 = vpop.f32.mrb[0].mxu0
        %v850 = vadd.f32 0.0, %v849
        %v851 = vpop.f32.mrb[0].mxu0
        %v852 = vadd.f32 0.0, %v851
        %v853 = vpop.f32.mrb[0].mxu0
        %v854 = vadd.f32 0.0, %v853
        %v855 = vpop.f32.mrb[0].mxu0
        %v856 = vadd.f32 0.0, %v855
        %857 = vmatprep.mubr.bf16.mxu0 0
        %858 = vmatmul.mubr.bf16.gmra.mrb[0].mxu0 %v602
        %v859 = vpop.f32.mrb[0].mxu0
        %v860 = vadd.f32 0.0, %v859
        %v861 = vpop.f32.mrb[0].mxu0
        %v862 = vadd.f32 0.0, %v861
        %v863 = vpop.f32.mrb[0].mxu0
        %v864 = vadd.f32 0.0, %v863
        %v865 = vpop.f32.mrb[0].mxu0
        %v866 = vadd.f32 0.0, %v865
        %867 = vdwg.mxu0
        %868 = vmatprep.subr.bf16.mxu0 %v734
        %869 = vmatpush1.bf16.msra.mxu0 %v733
        %870 = vmatprep.subr.bf16.mxu0 %v738
        %871 = vmatpush1.bf16.msra.mxu0 %v737
        %872 = vmatprep.subr.bf16.mxu0 %v742
        %873 = vmatpush1.bf16.msra.mxu0 %v741
        %874 = vmatprep.subr.bf16.mxu0 %v746
        %875 = vmatpush1.bf16.msra.mxu0 %v745
        %876 = vmatprep.subr.bf16.mxu0 %v750
        %877 = vmatpush1.bf16.msra.mxu0 %v749
        %878 = vmatprep.subr.bf16.mxu0 %v754
        %879 = vmatpush1.bf16.msra.mxu0 %v753
        %880 = vmatprep.subr.bf16.mxu0 %v758
        %881 = vmatpush1.bf16.msra.mxu0 %v757
        %882 = vmatprep.subr.bf16.mxu0 %v762
        %883 = vmatpush1.bf16.msra.mxu0 %v761
        %884 = vmatprep.subr.bf16.mxu0 0
        %885 = vmatpush1.bf16.msra.mxu0 0
        %886 = vmatprep.subr.bf16.mxu0 0
        %887 = vmatpush1.bf16.msra.mxu0 0
        %888 = vmatprep.subr.bf16.mxu0 0
        %889 = vmatpush1.bf16.msra.mxu0 0
        %890 = vmatprep.subr.bf16.mxu0 0
        %891 = vmatpush1.bf16.msra.mxu0 0
        %892 = vmatprep.subr.bf16.mxu0 0
        %893 = vmatpush1.bf16.msra.mxu0 0
        %894 = vmatprep.subr.bf16.mxu0 0
        %895 = vmatpush1.bf16.msra.mxu0 0
        %896 = vmatprep.subr.bf16.mxu0 0
        %897 = vmatpush1.bf16.msra.mxu0 0
        %898 = vmatprep.subr.bf16.mxu0 0
        %899 = vmatpush1.bf16.msra.mxu0 0
        %900 = vmatprep.mubr.bf16.mxu0 0
        %901 = vmatmul.mubr.bf16.gmra.mrb[0].mxu0 %v599
        %v902 = vpop.f32.mrb[0].mxu0
        %v903 = vadd.f32 0.0, %v902
        %v904 = vpop.f32.mrb[0].mxu0
        %v905 = vadd.f32 0.0, %v904
        %v906 = vpop.f32.mrb[0].mxu0
        %v907 = vadd.f32 0.0, %v906
        %v908 = vpop.f32.mrb[0].mxu0
        %v909 = vadd.f32 0.0, %v908
        %910 = vmatprep.mubr.bf16.mxu0 0
        %911 = vmatmul.mubr.bf16.gmra.mrb[0].mxu0 %v600
        %v912 = vpop.f32.mrb[0].mxu0
        %v913 = vadd.f32 0.0, %v912
        %v914 = vpop.f32.mrb[0].mxu0
        %v915 = vadd.f32 0.0, %v914
        %v916 = vpop.f32.mrb[0].mxu0
        %v917 = vadd.f32 0.0, %v916
        %v918 = vpop.f32.mrb[0].mxu0
        %v919 = vadd.f32 0.0, %v918
        %920 = vmatprep.mubr.bf16.mxu0 0
        %921 = vmatmul.mubr.bf16.gmra.mrb[0].mxu0 %v601
        %v922 = vpop.f32.mrb[0].mxu0
        %v923 = vadd.f32 0.0, %v922
        %v924 = vpop.f32.mrb[0].mxu0
        %v925 = vadd.f32 0.0, %v924
        %v926 = vpop.f32.mrb[0].mxu0
        %v927 = vadd.f32 0.0, %v926
        %v928 = vpop.f32.mrb[0].mxu0
        %v929 = vadd.f32 0.0, %v928
        %930 = vmatprep.mubr.bf16.mxu0 0
        %931 = vmatmul.mubr.bf16.gmra.mrb[0].mxu0 %v602
        %v932 = vpop.f32.mrb[0].mxu0
        %v933 = vadd.f32 0.0, %v932
        %v934 = vpop.f32.mrb[0].mxu0
        %v935 = vadd.f32 0.0, %v934
        %v936 = vpop.f32.mrb[0].mxu0
        %v937 = vadd.f32 0.0, %v936
        %v938 = vpop.f32.mrb[0].mxu0
        %v939 = vadd.f32 0.0, %v938
        %940 = vdwg.mxu0
        %v941 = vld [vmem:[#allocation12] sm:$0xff]
        %v942 = vld [vmem:[#allocation12 + $0x8] sm:$0xff]
        %v943 = vld [vmem:[#allocation12 + $0x10] sm:$0xf]
        %v944 = vld [vmem:[#allocation12 + $0x14] sm:$0xff]
        %v945 = vld [vmem:[#allocation12 + $0x1c] sm:$0xff]
        %v946 = vld [vmem:[#allocation12 + $0x24] sm:$0xf]
        %v947 = vld [vmem:[#allocation12 + $0x28] sm:$0xff]
        %v948 = vld [vmem:[#allocation12 + $0x30] sm:$0xff]
        %v949 = vld [vmem:[#allocation12 + $0x38] sm:$0xf]
        %v950 = vld [vmem:[#allocation12 + $0x3c] sm:$0xff]
        %v951 = vld [vmem:[#allocation12 + $0x44] sm:$0xff]
        %v952 = vld [vmem:[#allocation12 + $0x4c] sm:$0xf]
        %v953 = vld [vmem:[#allocation12 + $0x50] sm:$0xff]
        %v954 = vld [vmem:[#allocation12 + $0x58] sm:$0xff]
        %v955 = vld [vmem:[#allocation12 + $0x60] sm:$0xf]
        %v956 = vld [vmem:[#allocation12 + $0x64] sm:$0xff]
        %v957 = vld [vmem:[#allocation12 + $0x6c] sm:$0xff]
        %v958 = vld [vmem:[#allocation12 + $0x74] sm:$0xf]
        %v959 = vld [vmem:[#allocation12 + $0x78] sm:$0xff]
        %v960 = vld [vmem:[#allocation12 + $0x80] sm:$0xff]
        %v961 = vld [vmem:[#allocation12 + $0x88] sm:$0xf]
        %v962 = vld [vmem:[#allocation12 + $0x8c] sm:$0xff]
        %v963 = vld [vmem:[#allocation12 + $0x94] sm:$0xff]
        %v964 = vld [vmem:[#allocation12 + $0x9c] sm:$0xf]
        %v965 = vld [vmem:[#allocation12 + $0xa0] sm:$0xff]
        %v966 = vld [vmem:[#allocation12 + $0xa8] sm:$0xff]
        %v967 = vld [vmem:[#allocation12 + $0xb0] sm:$0xf]
        %v968 = vld [vmem:[#allocation12 + $0xb4] sm:$0xff]
        %v969 = vld [vmem:[#allocation12 + $0xbc] sm:$0xff]
        %v970 = vld [vmem:[#allocation12 + $0xc4] sm:$0xf]
        %v971 = vld [vmem:[#allocation12 + $0xc8] sm:$0xff]
        %v972 = vld [vmem:[#allocation12 + $0xd0] sm:$0xff]
        %v973 = vld [vmem:[#allocation12 + $0xd8] sm:$0xf]
        %v974 = vld [vmem:[#allocation12 + $0xdc] sm:$0xff]
        %v975 = vld [vmem:[#allocation12 + $0xe4] sm:$0xff]
        %v976 = vld [vmem:[#allocation12 + $0xec] sm:$0xf]
        %v977 = vld [vmem:[#allocation12 + $0xf0] sm:$0xff]
        %v978 = vld [vmem:[#allocation12 + $0xf8] sm:$0xff]
        %v979 = vld [vmem:[#allocation12 + $0x100] sm:$0xf]
        %v980 = vld [vmem:[#allocation12 + $0x104] sm:$0xff]
        %v981 = vld [vmem:[#allocation12 + $0x10c] sm:$0xff]
        %v982 = vld [vmem:[#allocation12 + $0x114] sm:$0xf]
        %v983 = vld [vmem:[#allocation12 + $0x118] sm:$0xff]
        %v984 = vld [vmem:[#allocation12 + $0x120] sm:$0xff]
        %v985 = vld [vmem:[#allocation12 + $0x128] sm:$0xf]
        %v986 = vld [vmem:[#allocation12 + $0x12c] sm:$0xff]
        %v987 = vld [vmem:[#allocation12 + $0x134] sm:$0xff]
        %v988 = vld [vmem:[#allocation12 + $0x13c] sm:$0xf]
        %v1037 = vunpack.c.l.b16 %v941
        %v1038 = vunpack.c.h.b16 %v941
        %v1039 = vunpack.c.l.b16 %v942
        %v1040 = vunpack.c.h.b16 %v942
        %v1041 = vunpack.c.l.b16 %v943
        %v1042 = vunpack.c.l.b16 %v944
        %v1043 = vunpack.c.h.b16 %v944
        %v1044 = vunpack.c.l.b16 %v945
        %v1045 = vunpack.c.h.b16 %v945
        %v1046 = vunpack.c.l.b16 %v946
        %v1047 = vunpack.c.l.b16 %v947
        %v1048 = vunpack.c.h.b16 %v947
        %v1049 = vunpack.c.l.b16 %v948
        %v1050 = vunpack.c.h.b16 %v948
        %v1051 = vunpack.c.l.b16 %v949
        %v1052 = vunpack.c.l.b16 %v950
        %v1053 = vunpack.c.h.b16 %v950
        %v1054 = vunpack.c.l.b16 %v951
        %v1055 = vunpack.c.h.b16 %v951
        %v1056 = vunpack.c.l.b16 %v952
        %v1057 = vunpack.c.l.b16 %v953
        %v1058 = vunpack.c.h.b16 %v953
        %v1059 = vunpack.c.l.b16 %v954
        %v1060 = vunpack.c.h.b16 %v954
        %v1061 = vunpack.c.l.b16 %v955
        %v1062 = vunpack.c.l.b16 %v956
        %v1063 = vunpack.c.h.b16 %v956
        %v1064 = vunpack.c.l.b16 %v957
        %v1065 = vunpack.c.h.b16 %v957
        %v1066 = vunpack.c.l.b16 %v958
        %v1067 = vunpack.c.l.b16 %v959
        %v1068 = vunpack.c.h.b16 %v959
        %v1069 = vunpack.c.l.b16 %v960
        %v1070 = vunpack.c.h.b16 %v960
        %v1071 = vunpack.c.l.b16 %v961
        %v1072 = vunpack.c.l.b16 %v962
        %v1073 = vunpack.c.h.b16 %v962
        %v1074 = vunpack.c.l.b16 %v963
        %v1075 = vunpack.c.h.b16 %v963
        %v1076 = vunpack.c.l.b16 %v964
        %v1077 = vunpack.c.l.b16 %v965
        %v1078 = vunpack.c.h.b16 %v965
        %v1079 = vunpack.c.l.b16 %v966
        %v1080 = vunpack.c.h.b16 %v966
        %v1081 = vunpack.c.l.b16 %v967
        %v1082 = vunpack.c.l.b16 %v968
        %v1083 = vunpack.c.h.b16 %v968
        %v1084 = vunpack.c.l.b16 %v969
        %v1085 = vunpack.c.h.b16 %v969
        %v1086 = vunpack.c.l.b16 %v970
        %v1087 = vunpack.c.l.b16 %v971
        %v1088 = vunpack.c.h.b16 %v971
        %v1089 = vunpack.c.l.b16 %v972
        %v1090 = vunpack.c.h.b16 %v972
        %v1091 = vunpack.c.l.b16 %v973
        %v1092 = vunpack.c.l.b16 %v974
        %v1093 = vunpack.c.h.b16 %v974
        %v1094 = vunpack.c.l.b16 %v975
        %v1095 = vunpack.c.h.b16 %v975
        %v1096 = vunpack.c.l.b16 %v976
        %v1097 = vunpack.c.l.b16 %v977
        %v1098 = vunpack.c.h.b16 %v977
        %v1099 = vunpack.c.l.b16 %v978
        %v1100 = vunpack.c.h.b16 %v978
        %v1101 = vunpack.c.l.b16 %v979
        %v1102 = vunpack.c.l.b16 %v980
        %v1103 = vunpack.c.h.b16 %v980
        %v1104 = vunpack.c.l.b16 %v981
        %v1105 = vunpack.c.h.b16 %v981
        %v1106 = vunpack.c.l.b16 %v982
        %v1107 = vunpack.c.l.b16 %v983
        %v1108 = vunpack.c.h.b16 %v983
        %v1109 = vunpack.c.l.b16 %v984
        %v1110 = vunpack.c.h.b16 %v984
        %v1111 = vunpack.c.l.b16 %v985
        %v1112 = vunpack.c.l.b16 %v986
        %v1113 = vunpack.c.h.b16 %v986
        %v1114 = vunpack.c.l.b16 %v987
        %v1115 = vunpack.c.h.b16 %v987
        %v1116 = vunpack.c.l.b16 %v988
        %v1117 = vpack.c.b16 %v1042, %v1037
        %v1118 = vpack.c.b16 %v1043, %v1038
        %v1119 = vpack.c.b16 %v1044, %v1039
        %v1120 = vpack.c.b16 %v1045, %v1040
        %v1121 = vpack.c.b16 %v1046, %v1041
        %v1122 = vpack.c.b16 %v1052, %v1047
        %v1123 = vpack.c.b16 %v1053, %v1048
        %v1124 = vpack.c.b16 %v1054, %v1049
        %v1125 = vpack.c.b16 %v1055, %v1050
        %v1126 = vpack.c.b16 %v1056, %v1051
        %v1127 = vpack.c.b16 %v1062, %v1057
        %v1128 = vpack.c.b16 %v1063, %v1058
        %v1129 = vpack.c.b16 %v1064, %v1059
        %v1130 = vpack.c.b16 %v1065, %v1060
        %v1131 = vpack.c.b16 %v1066, %v1061
        %v1132 = vpack.c.b16 %v1072, %v1067
        %v1133 = vpack.c.b16 %v1073, %v1068
        %v1134 = vpack.c.b16 %v1074, %v1069
        %v1135 = vpack.c.b16 %v1075, %v1070
        %v1136 = vpack.c.b16 %v1076, %v1071
        %v1137 = vpack.c.b16 %v1082, %v1077
        %v1138 = vpack.c.b16 %v1083, %v1078
        %v1139 = vpack.c.b16 %v1084, %v1079
        %v1140 = vpack.c.b16 %v1085, %v1080
        %v1141 = vpack.c.b16 %v1086, %v1081
        %v1142 = vpack.c.b16 %v1092, %v1087
        %v1143 = vpack.c.b16 %v1093, %v1088
        %v1144 = vpack.c.b16 %v1094, %v1089
        %v1145 = vpack.c.b16 %v1095, %v1090
        %v1146 = vpack.c.b16 %v1096, %v1091
        %v1147 = vpack.c.b16 %v1102, %v1097
        %v1148 = vpack.c.b16 %v1103, %v1098
        %v1149 = vpack.c.b16 %v1104, %v1099
        %v1150 = vpack.c.b16 %v1105, %v1100
        %v1151 = vpack.c.b16 %v1106, %v1101
        %v1152 = vpack.c.b16 %v1112, %v1107
        %v1153 = vpack.c.b16 %v1113, %v1108
        %v1154 = vpack.c.b16 %v1114, %v1109
        %v1155 = vpack.c.b16 %v1115, %v1110
        %v1156 = vpack.c.b16 %v1116, %v1111
        %1197 = vmatprep.subr.bf16.mxu0 %v1118
        %1198 = vmatpush1.bf16.msra.mxu0 %v1117
        %1199 = vmatprep.subr.bf16.mxu0 %v1123
        %1200 = vmatpush1.bf16.msra.mxu0 %v1122
        %1201 = vmatprep.subr.bf16.mxu0 %v1128
        %1202 = vmatpush1.bf16.msra.mxu0 %v1127
        %1203 = vmatprep.subr.bf16.mxu0 %v1133
        %1204 = vmatpush1.bf16.msra.mxu0 %v1132
        %1205 = vmatprep.subr.bf16.mxu0 %v1138
        %1206 = vmatpush1.bf16.msra.mxu0 %v1137
        %1207 = vmatprep.subr.bf16.mxu0 %v1143
        %1208 = vmatpush1.bf16.msra.mxu0 %v1142
        %1209 = vmatprep.subr.bf16.mxu0 %v1148
        %1210 = vmatpush1.bf16.msra.mxu0 %v1147
        %1211 = vmatprep.subr.bf16.mxu0 %v1153
        %1212 = vmatpush1.bf16.msra.mxu0 %v1152
        %1213 = vmatprep.subr.bf16.mxu0 0
        %1214 = vmatpush1.bf16.msra.mxu0 0
        %1215 = vmatprep.subr.bf16.mxu0 0
        %1216 = vmatpush1.bf16.msra.mxu0 0
        %1217 = vmatprep.subr.bf16.mxu0 0
        %1218 = vmatpush1.bf16.msra.mxu0 0
        %1219 = vmatprep.subr.bf16.mxu0 0
        %1220 = vmatpush1.bf16.msra.mxu0 0
        %1221 = vmatprep.subr.bf16.mxu0 0
        %1222 = vmatpush1.bf16.msra.mxu0 0
        %1223 = vmatprep.subr.bf16.mxu0 0
        %1224 = vmatpush1.bf16.msra.mxu0 0
        %1225 = vmatprep.subr.bf16.mxu0 0
        %1226 = vmatpush1.bf16.msra.mxu0 0
        %1227 = vmatprep.subr.bf16.mxu0 0
        %1228 = vmatpush1.bf16.msra.mxu0 0
        %1229 = vmatprep.mubr.bf16.mxu0 0
        %1230 = vmatmul.mubr.bf16.gmra.mrb[0].mxu0 %v599
        %v1231 = vpop.f32.mrb[0].mxu0
        %v1232 = vadd.f32 0.0, %v1231
        %v1233 = vpop.f32.mrb[0].mxu0
        %v1234 = vadd.f32 0.0, %v1233
        %v1235 = vpop.f32.mrb[0].mxu0
        %v1236 = vadd.f32 0.0, %v1235
        %v1237 = vpop.f32.mrb[0].mxu0
        %v1238 = vadd.f32 0.0, %v1237
        %1239 = vmatprep.mubr.bf16.mxu0 0
        %1240 = vmatmul.mubr.bf16.gmra.mrb[0].mxu0 %v600
        %v1241 = vpop.f32.mrb[0].mxu0
        %v1242 = vadd.f32 0.0, %v1241
        %v1243 = vpop.f32.mrb[0].mxu0
        %v1244 = vadd.f32 0.0, %v1243
        %v1245 = vpop.f32.mrb[0].mxu0
        %v1246 = vadd.f32 0.0, %v1245
        %v1247 = vpop.f32.mrb[0].mxu0
        %v1248 = vadd.f32 0.0, %v1247
        %1249 = vmatprep.mubr.bf16.mxu0 0
        %1250 = vmatmul.mubr.bf16.gmra.mrb[0].mxu0 %v601
        %v1251 = vpop.f32.mrb[0].mxu0
        %v1252 = vadd.f32 0.0, %v1251
        %v1253 = vpop.f32.mrb[0].mxu0
        %v1254 = vadd.f32 0.0, %v1253
        %v1255 = vpop.f32.mrb[0].mxu0
        %v1256 = vadd.f32 0.0, %v1255
        %v1257 = vpop.f32.mrb[0].mxu0
        %v1258 = vadd.f32 0.0, %v1257
        %1259 = vmatprep.mubr.bf16.mxu0 0
        %1260 = vmatmul.mubr.bf16.gmra.mrb[0].mxu0 %v602
        %v1261 = vpop.f32.mrb[0].mxu0
        %v1262 = vadd.f32 0.0, %v1261
        %v1263 = vpop.f32.mrb[0].mxu0
        %v1264 = vadd.f32 0.0, %v1263
        %v1265 = vpop.f32.mrb[0].mxu0
        %v1266 = vadd.f32 0.0, %v1265
        %v1267 = vpop.f32.mrb[0].mxu0
        %v1268 = vadd.f32 0.0, %v1267
        %1269 = vdwg.mxu0
        %1270 = vmatprep.subr.bf16.mxu0 %v1120
        %1271 = vmatpush1.bf16.msra.mxu0 %v1119
        %1272 = vmatprep.subr.bf16.mxu0 %v1125
        %1273 = vmatpush1.bf16.msra.mxu0 %v1124
        %1274 = vmatprep.subr.bf16.mxu0 %v1130
        %1275 = vmatpush1.bf16.msra.mxu0 %v1129
        %1276 = vmatprep.subr.bf16.mxu0 %v1135
        %1277 = vmatpush1.bf16.msra.mxu0 %v1134
        %1278 = vmatprep.subr.bf16.mxu0 %v1140
        %1279 = vmatpush1.bf16.msra.mxu0 %v1139
        %1280 = vmatprep.subr.bf16.mxu0 %v1145
        %1281 = vmatpush1.bf16.msra.mxu0 %v1144
        %1282 = vmatprep.subr.bf16.mxu0 %v1150
        %1283 = vmatpush1.bf16.msra.mxu0 %v1149
        %1284 = vmatprep.subr.bf16.mxu0 %v1155
        %1285 = vmatpush1.bf16.msra.mxu0 %v1154
        %1286 = vmatprep.subr.bf16.mxu0 0
        %1287 = vmatpush1.bf16.msra.mxu0 0
        %1288 = vmatprep.subr.bf16.mxu0 0
        %1289 = vmatpush1.bf16.msra.mxu0 0
        %1290 = vmatprep.subr.bf16.mxu0 0
        %1291 = vmatpush1.bf16.msra.mxu0 0
        %1292 = vmatprep.subr.bf16.mxu0 0
        %1293 = vmatpush1.bf16.msra.mxu0 0
        %1294 = vmatprep.subr.bf16.mxu0 0
        %1295 = vmatpush1.bf16.msra.mxu0 0
        %1296 = vmatprep.subr.bf16.mxu0 0
        %1297 = vmatpush1.bf16.msra.mxu0 0
        %1298 = vmatprep.subr.bf16.mxu0 0
        %1299 = vmatpush1.bf16.msra.mxu0 0
        %1300 = vmatprep.subr.bf16.mxu0 0
        %1301 = vmatpush1.bf16.msra.mxu0 0
        %1302 = vmatprep.mubr.bf16.mxu0 0
        %1303 = vmatmul.mubr.bf16.gmra.mrb[0].mxu0 %v599
        %v1304 = vpop.f32.mrb[0].mxu0
        %v1305 = vadd.f32 0.0, %v1304
        %v1306 = vpop.f32.mrb[0].mxu0
        %v1307 = vadd.f32 0.0, %v1306
        %v1308 = vpop.f32.mrb[0].mxu0
        %v1309 = vadd.f32 0.0, %v1308
        %v1310 = vpop.f32.mrb[0].mxu0
        %v1311 = vadd.f32 0.0, %v1310
        %1312 = vmatprep.mubr.bf16.mxu0 0
        %1313 = vmatmul.mubr.bf16.gmra.mrb[0].mxu0 %v600
        %v1314 = vpop.f32.mrb[0].mxu0
        %v1315 = vadd.f32 0.0, %v1314
        %v1316 = vpop.f32.mrb[0].mxu0
        %v1317 = vadd.f32 0.0, %v1316
        %v1318 = vpop.f32.mrb[0].mxu0
        %v1319 = vadd.f32 0.0, %v1318
        %v1320 = vpop.f32.mrb[0].mxu0
        %v1321 = vadd.f32 0.0, %v1320
        %1322 = vmatprep.mubr.bf16.mxu0 0
        %1323 = vmatmul.mubr.bf16.gmra.mrb[0].mxu0 %v601
        %v1324 = vpop.f32.mrb[0].mxu0
        %v1325 = vadd.f32 0.0, %v1324
        %v1326 = vpop.f32.mrb[0].mxu0
        %v1327 = vadd.f32 0.0, %v1326
        %v1328 = vpop.f32.mrb[0].mxu0
        %v1329 = vadd.f32 0.0, %v1328
        %v1330 = vpop.f32.mrb[0].mxu0
        %v1331 = vadd.f32 0.0, %v1330
        %1332 = vmatprep.mubr.bf16.mxu0 0
        %1333 = vmatmul.mubr.bf16.gmra.mrb[0].mxu0 %v602
        %v1334 = vpop.f32.mrb[0].mxu0
        %v1335 = vadd.f32 0.0, %v1334
        %v1336 = vpop.f32.mrb[0].mxu0
        %v1337 = vadd.f32 0.0, %v1336
        %v1338 = vpop.f32.mrb[0].mxu0
        %v1339 = vadd.f32 0.0, %v1338
        %v1340 = vpop.f32.mrb[0].mxu0
        %v1341 = vadd.f32 0.0, %v1340
        %1342 = vdwg.mxu0
        %1343 = vmatprep.subr.bf16.mxu0 0
        %1344 = vmatpush1.bf16.msra.mxu0 %v1121
        %1345 = vmatprep.subr.bf16.mxu0 0
        %1346 = vmatpush1.bf16.msra.mxu0 %v1126
        %1347 = vmatprep.subr.bf16.mxu0 0
        %1348 = vmatpush1.bf16.msra.mxu0 %v1131
        %1349 = vmatprep.subr.bf16.mxu0 0
        %1350 = vmatpush1.bf16.msra.mxu0 %v1136
        %1351 = vmatprep.subr.bf16.mxu0 0
        %1352 = vmatpush1.bf16.msra.mxu0 %v1141
        %1353 = vmatprep.subr.bf16.mxu0 0
        %1354 = vmatpush1.bf16.msra.mxu0 %v1146
        %1355 = vmatprep.subr.bf16.mxu0 0
        %1356 = vmatpush1.bf16.msra.mxu0 %v1151
        %1357 = vmatprep.subr.bf16.mxu0 0
        %1358 = vmatpush1.bf16.msra.mxu0 %v1156
        %1359 = vmatprep.subr.bf16.mxu0 0
        %1360 = vmatpush1.bf16.msra.mxu0 0
        %1361 = vmatprep.subr.bf16.mxu0 0
        %1362 = vmatpush1.bf16.msra.mxu0 0
        %1363 = vmatprep.subr.bf16.mxu0 0
        %1364 = vmatpush1.bf16.msra.mxu0 0
        %1365 = vmatprep.subr.bf16.mxu0 0
        %1366 = vmatpush1.bf16.msra.mxu0 0
        %1367 = vmatprep.subr.bf16.mxu0 0
        %1368 = vmatpush1.bf16.msra.mxu0 0
        %1369 = vmatprep.subr.bf16.mxu0 0
        %1370 = vmatpush1.bf16.msra.mxu0 0
        %1371 = vmatprep.subr.bf16.mxu0 0
        %1372 = vmatpush1.bf16.msra.mxu0 0
        %1373 = vmatprep.subr.bf16.mxu0 0
        %1374 = vmatpush1.bf16.msra.mxu0 0
        %1375 = vmatprep.mubr.bf16.mxu0 0
        %1376 = vmatmul.mubr.bf16.gmra.mrb[0].mxu0 %v599
        %v1377 = vpop.f32.mrb[0].mxu0
        %v1378 = vadd.f32 0.0, %v1377
        %v1379 = vpop.f32.mrb[0].mxu0
        %v1380 = vpop.f32.mrb[0].mxu0
        %v1381 = vadd.f32 0.0, %v1380
        %v1382 = vpop.f32.mrb[0].mxu0
        %1383 = vmatprep.mubr.bf16.mxu0 0
        %1384 = vmatmul.mubr.bf16.gmra.mrb[0].mxu0 %v600
        %v1385 = vpop.f32.mrb[0].mxu0
        %v1386 = vadd.f32 0.0, %v1385
        %v1387 = vpop.f32.mrb[0].mxu0
        %v1388 = vpop.f32.mrb[0].mxu0
        %v1389 = vadd.f32 0.0, %v1388
        %v1390 = vpop.f32.mrb[0].mxu0
        %1391 = vmatprep.mubr.bf16.mxu0 0
        %1392 = vmatmul.mubr.bf16.gmra.mrb[0].mxu0 %v601
        %v1393 = vpop.f32.mrb[0].mxu0
        %v1394 = vadd.f32 0.0, %v1393
        %v1395 = vpop.f32.mrb[0].mxu0
        %v1396 = vpop.f32.mrb[0].mxu0
        %v1397 = vadd.f32 0.0, %v1396
        %v1398 = vpop.f32.mrb[0].mxu0
        %1399 = vmatprep.mubr.bf16.mxu0 0
        %1400 = vmatmul.mubr.bf16.gmra.mrb[0].mxu0 %v602
        %v1401 = vpop.f32.mrb[0].mxu0
        %v1402 = vadd.f32 0.0, %v1401
        %v1403 = vpop.f32.mrb[0].mxu0
        %v1404 = vpop.f32.mrb[0].mxu0
        %v1405 = vadd.f32 0.0, %v1404
        %v1406 = vpop.f32.mrb[0].mxu0
        %1407 = vdwg.mxu0
        %1408 = vst [vmem:[#allocation2] sm:$0xff] %v1232
        %1409 = vst [vmem:[#allocation2 + $0x8] sm:$0xff] %v1234
        %1410 = vst [vmem:[#allocation2 + $0x10] sm:$0xff] %v1305
        %1411 = vst [vmem:[#allocation2 + $0x18] sm:$0xff] %v1307
        %1412 = vst [vmem:[#allocation2 + $0x20] sm:$0xff] %v1378
        %1413 = vst [vmem:[#allocation2 + $0x28] sm:$0xff] %v1236
        %1414 = vst [vmem:[#allocation2 + $0x30] sm:$0xff] %v1238
        %1415 = vst [vmem:[#allocation2 + $0x38] sm:$0xff] %v1309
        %1416 = vst [vmem:[#allocation2 + $0x40] sm:$0xff] %v1311
        %1417 = vst [vmem:[#allocation2 + $0x48] sm:$0xff] %v1381
        %1418 = vst [vmem:[#allocation2 + $0x50] sm:$0xff] %v1242
        %1419 = vst [vmem:[#allocation2 + $0x58] sm:$0xff] %v1244
        %1420 = vst [vmem:[#allocation2 + $0x60] sm:$0xff] %v1315
        %1421 = vst [vmem:[#allocation2 + $0x68] sm:$0xff] %v1317
        %1422 = vst [vmem:[#allocation2 + $0x70] sm:$0xff] %v1386
        %1423 = vst [vmem:[#allocation2 + $0x78] sm:$0xff] %v1246
        %1424 = vst [vmem:[#allocation2 + $0x80] sm:$0xff] %v1248
        %1425 = vst [vmem:[#allocation2 + $0x88] sm:$0xff] %v1319
        %1426 = vst [vmem:[#allocation2 + $0x90] sm:$0xff] %v1321
        %1427 = vst [vmem:[#allocation2 + $0x98] sm:$0xff] %v1389
        %1428 = vst [vmem:[#allocation2 + $0xa0] sm:$0xff] %v1252
        %1429 = vst [vmem:[#allocation2 + $0xa8] sm:$0xff] %v1254
        %1430 = vst [vmem:[#allocation2 + $0xb0] sm:$0xff] %v1325
        %1431 = vst [vmem:[#allocation2 + $0xb8] sm:$0xff] %v1327
        %1432 = vst [vmem:[#allocation2 + $0xc0] sm:$0xff] %v1394
        %1433 = vst [vmem:[#allocation2 + $0xc8] sm:$0xff] %v1256
        %1434 = vst [vmem:[#allocation2 + $0xd0] sm:$0xff] %v1258
        %1435 = vst [vmem:[#allocation2 + $0xd8] sm:$0xff] %v1329
        %1436 = vst [vmem:[#allocation2 + $0xe0] sm:$0xff] %v1331
        %1437 = vst [vmem:[#allocation2 + $0xe8] sm:$0xff] %v1397
        %1438 = vst [vmem:[#allocation2 + $0xf0] sm:$0xff] %v1262
        %1439 = vst [vmem:[#allocation2 + $0xf8] sm:$0xff] %v1264
        %1440 = vst [vmem:[#allocation2 + $0x100] sm:$0xff] %v1335
        %1441 = vst [vmem:[#allocation2 + $0x108] sm:$0xff] %v1337
        %1442 = vst [vmem:[#allocation2 + $0x110] sm:$0xff] %v1402
        %1443 = vst [vmem:[#allocation2 + $0x118] sm:$0xff] %v1266
        %1444 = vst [vmem:[#allocation2 + $0x120] sm:$0xff] %v1268
        %1445 = vst [vmem:[#allocation2 + $0x128] sm:$0xff] %v1339
        %1446 = vst [vmem:[#allocation2 + $0x130] sm:$0xff] %v1341
        %1447 = vst [vmem:[#allocation2 + $0x138] sm:$0xff] %v1405
        %1448 = vst [vmem:[#allocation2 + $0x140] sm:$0xff] 0.0
        %1449 = vst [vmem:[#allocation2 + $0x148] sm:$0xff] 0.0
        %1450 = vst [vmem:[#allocation2 + $0x150] sm:$0xff] 0.0
        %1451 = vst [vmem:[#allocation2 + $0x158] sm:$0xff] 0.0
        %1452 = vst [vmem:[#allocation2 + $0x160] sm:$0xff] 0.0
        %1453 = vst [vmem:[#allocation2 + $0x168] sm:$0x1] 0.0
        %1454 = vst [vmem:[#allocation2 + $0x170] sm:$0x1] 0.0
        %1455 = vst [vmem:[#allocation2 + $0x178] sm:$0x1] 0.0
        %1456 = vst [vmem:[#allocation2 + $0x180] sm:$0x1] 0.0
        %1457 = vst [vmem:[#allocation2 + $0x188] sm:$0x1] 0.0
        %v1458 = vld [vmem:[#allocation6] sm:$0xff]
        %v1459 = vld [vmem:[#allocation6 + $0x8] sm:$0xff]
        %v1460 = vld [vmem:[#allocation6 + $0x10] sm:$0xff]
        %v1461 = vld [vmem:[#allocation6 + $0x18] sm:$0xff]
        %v1462 = vld [vmem:[#allocation6 + $0x20] sm:$0xff]
        %v1463 = vld [vmem:[#allocation6 + $0x28] sm:$0xff]
        %v1464 = vld [vmem:[#allocation6 + $0x30] sm:$0xff]
        %v1465 = vld [vmem:[#allocation6 + $0x38] sm:$0xff]
        %v1466 = vld [vmem:[#allocation2] sm:$0xfe]
        %v1467 = vld [vmem:[#allocation2 + $0x8] sm:$0xfe]
        %v1468 = vld [vmem:[#allocation2 + $0x28] sm:$0xff]
        %v1469 = vld [vmem:[#allocation2 + $0x30] sm:$0xff]
        %v1470 = vld [vmem:[#allocation2 + $0x50] sm:$0xff]
        %v1471 = vld [vmem:[#allocation2 + $0x58] sm:$0xff]
        %v1472 = vld [vmem:[#allocation2 + $0x78] sm:$0xff]
        %v1473 = vld [vmem:[#allocation2 + $0x80] sm:$0xff]
        %v1474 = vld [vmem:[#allocation2 + $0xa0] sm:$0xff]
        %v1475 = vld [vmem:[#allocation2 + $0xa8] sm:$0xff]
        %v1476 = vld [vmem:[#allocation2 + $0xc8] sm:$0xff]
        %v1477 = vld [vmem:[#allocation2 + $0xd0] sm:$0xff]
        %v1478 = vld [vmem:[#allocation2 + $0xf0] sm:$0xff]
        %v1479 = vld [vmem:[#allocation2 + $0xf8] sm:$0xff]
        %v1480 = vld [vmem:[#allocation2 + $0x118] sm:$0xff]
        %v1481 = vld [vmem:[#allocation2 + $0x120] sm:$0xff]
        %v1482 = vld [vmem:[#allocation2 + $0x140] sm:$0x1]
        %v1483 = vld [vmem:[#allocation2 + $0x148] sm:$0x1]
        %1485 = vset.pattern.permute.xlu0 0
        %1486 = vperm.xlu0 %1485, %v1458
        %v1487 = vpop.permute.xlu0 %1486
        %1489 = vset.pattern.permute.xlu0 0
        %1490 = vperm.xlu0 %1489, %v1459
        %v1491 = vpop.permute.xlu0 %1490
        %1493 = vset.pattern.permute.xlu0 0
        %1494 = vperm.xlu0 %1493, %v1460
        %v1495 = vpop.permute.xlu0 %1494
        %1497 = vset.pattern.permute.xlu0 0
        %1498 = vperm.xlu0 %1497, %v1461
        %v1499 = vpop.permute.xlu0 %1498
        %1501 = vset.pattern.permute.xlu0 0
        %1502 = vperm.xlu0 %1501, %v1462
        %v1503 = vpop.permute.xlu0 %1502
        %1505 = vset.pattern.permute.xlu0 0
        %1506 = vperm.xlu0 %1505, %v1463
        %v1507 = vpop.permute.xlu0 %1506
        %1509 = vset.pattern.permute.xlu0 0
        %1510 = vperm.xlu0 %1509, %v1464
        %v1511 = vpop.permute.xlu0 %1510
        %1513 = vset.pattern.permute.xlu0 0
        %1514 = vperm.xlu0 %1513, %v1465
        %v1515 = vpop.permute.xlu0 %1514
        %vm1516 = vcmask 1040384
        %v1517 = vrot.slane %v1487, 7
        %v1518 = vrot.slane %v1491, 7
        %v1519 = vsel %vm1516, %v1517, %v1518
        %v1520 = vrot.slane %v1495, 7
        %v1521 = vsel %vm1516, %v1518, %v1520
        %v1522 = vrot.slane %v1499, 7
        %v1523 = vsel %vm1516, %v1520, %v1522
        %v1524 = vrot.slane %v1503, 7
        %v1525 = vsel %vm1516, %v1522, %v1524
        %v1526 = vrot.slane %v1507, 7
        %v1527 = vsel %vm1516, %v1524, %v1526
        %v1528 = vrot.slane %v1511, 7
        %v1529 = vsel %vm1516, %v1526, %v1528
        %v1530 = vrot.slane %v1515, 7
        %v1531 = vsel %vm1516, %v1528, %v1530
        %v1541 = vmul.f32 %v1466, %v1517
        %v1542 = vmul.f32 %v1467, %v1517
        %v1543 = vmul.f32 %v1468, %v1519
        %v1544 = vmul.f32 %v1469, %v1519
        %v1545 = vmul.f32 %v1470, %v1521
        %v1546 = vmul.f32 %v1471, %v1521
        %v1547 = vmul.f32 %v1472, %v1523
        %v1548 = vmul.f32 %v1473, %v1523
        %v1549 = vmul.f32 %v1474, %v1525
        %v1550 = vmul.f32 %v1475, %v1525
        %v1551 = vmul.f32 %v1476, %v1527
        %v1552 = vmul.f32 %v1477, %v1527
        %v1553 = vmul.f32 %v1478, %v1529
        %v1554 = vmul.f32 %v1479, %v1529
        %v1555 = vmul.f32 %v1480, %v1531
        %v1556 = vmul.f32 %v1481, %v1531
        %v1557 = vmul.f32 %v1482, %v1530
        %v1558 = vmul.f32 %v1483, %v1530
        %v1559 = vld [vmem:[#allocation2 + $0x38] sm:$0xff]
        %v1560 = vld [vmem:[#allocation2 + $0x40] sm:$0xff]
        %v1561 = vld [vmem:[#allocation2 + $0x60] sm:$0xff]
        %v1562 = vld [vmem:[#allocation2 + $0x68] sm:$0xff]
        %v1563 = vld [vmem:[#allocation2 + $0x88] sm:$0xff]
        %v1564 = vld [vmem:[#allocation2 + $0x90] sm:$0xff]
        %v1565 = vld [vmem:[#allocation2 + $0xb0] sm:$0xff]
        %v1566 = vld [vmem:[#allocation2 + $0xb8] sm:$0xff]
        %v1567 = vld [vmem:[#allocation2 + $0xd8] sm:$0xff]
        %v1568 = vld [vmem:[#allocation2 + $0xe0] sm:$0xff]
        %v1569 = vld [vmem:[#allocation2 + $0x100] sm:$0xff]
        %v1570 = vld [vmem:[#allocation2 + $0x108] sm:$0xff]
        %v1571 = vld [vmem:[#allocation2 + $0x128] sm:$0xff]
        %v1572 = vld [vmem:[#allocation2 + $0x130] sm:$0xff]
        %v1573 = vld [vmem:[#allocation2 + $0x150] sm:$0xff]
        %v1574 = vld [vmem:[#allocation2 + $0x158] sm:$0xff]
        %v1575 = vld [vmem:[#allocation2 + $0x48] sm:$0xfe]
        %v1576 = vld [vmem:[#allocation2 + $0x70] sm:$0xff]
        %v1577 = vld [vmem:[#allocation2 + $0x98] sm:$0xff]
        %v1578 = vld [vmem:[#allocation2 + $0xc0] sm:$0xff]
        %v1579 = vld [vmem:[#allocation2 + $0xe8] sm:$0xff]
        %v1580 = vld [vmem:[#allocation2 + $0x110] sm:$0xff]
        %v1581 = vld [vmem:[#allocation2 + $0x138] sm:$0xff]
        %v1582 = vld [vmem:[#allocation2 + $0x160] sm:$0xff]
        %v1583 = vld [vmem:[#allocation2 + $0x188] sm:$0x1]
        %v1584 = vmul.f32 %v1575, %v1517
        %v1585 = vmul.f32 %v1576, %v1519
        %v1586 = vmul.f32 %v1577, %v1521
        %v1587 = vmul.f32 %v1578, %v1523
        %v1588 = vmul.f32 %v1579, %v1525
        %v1589 = vmul.f32 %v1580, %v1527
        %v1590 = vmul.f32 %v1581, %v1529
        %v1591 = vmul.f32 %v1582, %v1531
        %v1592 = vmul.f32 %v1583, %v1530
        %vm1602 = vcmask 1046528
        %v1603 = vrot.slane %v1541, 1
        %v1604 = vrot.slane %v1543, 1
        %v1605 = vsel %vm1602, %v1603, %v1604
        %v1606 = vrot.slane %v1545, 1
        %v1607 = vsel %vm1602, %v1604, %v1606
        %v1608 = vrot.slane %v1547, 1
        %v1609 = vsel %vm1602, %v1606, %v1608
        %v1610 = vrot.slane %v1549, 1
        %v1611 = vsel %vm1602, %v1608, %v1610
        %v1612 = vrot.slane %v1551, 1
        %v1613 = vsel %vm1602, %v1610, %v1612
        %v1614 = vrot.slane %v1553, 1
        %v1615 = vsel %vm1602, %v1612, %v1614
        %v1616 = vrot.slane %v1555, 1
        %v1617 = vsel %vm1602, %v1614, %v1616
        %v1618 = vrot.slane %v1557, 1
        %v1619 = vsel %vm1602, %v1616, %v1618
        %v1628 = vadd.f32 %v832, %v1605
        %v1629 = vadd.f32 %v836, %v1607
        %v1630 = vadd.f32 %v842, %v1609
        %v1631 = vadd.f32 %v846, %v1611
        %v1632 = vadd.f32 %v852, %v1613
        %v1633 = vadd.f32 %v856, %v1615
        %v1634 = vadd.f32 %v862, %v1617
        %v1635 = vadd.f32 %v866, %v1619
        %v1636 = vadd.f32 %v903, %v1559
        %v1637 = vadd.f32 %v907, %v1561
        %v1638 = vadd.f32 %v913, %v1563
        %v1639 = vadd.f32 %v917, %v1565
        %v1640 = vadd.f32 %v923, %v1567
        %v1641 = vadd.f32 %v927, %v1569
        %v1642 = vadd.f32 %v933, %v1571
        %v1643 = vadd.f32 %v937, %v1573
        %v1653 = vrot.slane %v1542, 1
        %v1654 = vrot.slane %v1544, 1
        %v1655 = vsel %vm1602, %v1653, %v1654
        %v1656 = vrot.slane %v1546, 1
        %v1657 = vsel %vm1602, %v1654, %v1656
        %v1658 = vrot.slane %v1548, 1
        %v1659 = vsel %vm1602, %v1656, %v1658
        %v1660 = vrot.slane %v1550, 1
        %v1661 = vsel %vm1602, %v1658, %v1660
        %v1662 = vrot.slane %v1552, 1
        %v1663 = vsel %vm1602, %v1660, %v1662
        %v1664 = vrot.slane %v1554, 1
        %v1665 = vsel %vm1602, %v1662, %v1664
        %v1666 = vrot.slane %v1556, 1
        %v1667 = vsel %vm1602, %v1664, %v1666
        %v1668 = vrot.slane %v1558, 1
        %v1669 = vsel %vm1602, %v1666, %v1668
        %v1678 = vadd.f32 %v905, %v1655
        %v1679 = vadd.f32 %v909, %v1657
        %v1680 = vadd.f32 %v915, %v1659
        %v1681 = vadd.f32 %v919, %v1661
        %v1682 = vadd.f32 %v925, %v1663
        %v1683 = vadd.f32 %v929, %v1665
        %v1684 = vadd.f32 %v935, %v1667
        %v1685 = vadd.f32 %v939, %v1669
        %v1686 = vadd.f32 %v1678, %v1560
        %v1687 = vadd.f32 %v1679, %v1562
        %v1688 = vadd.f32 %v1680, %v1564
        %v1689 = vadd.f32 %v1681, %v1566
        %v1690 = vadd.f32 %v1682, %v1568
        %v1691 = vadd.f32 %v1683, %v1570
        %v1692 = vadd.f32 %v1684, %v1572
        %v1693 = vadd.f32 %v1685, %v1574
        %v1703 = vrot.slane %v1584, 1
        %v1704 = vrot.slane %v1585, 1
        %v1705 = vsel %vm1602, %v1703, %v1704
        %v1706 = vrot.slane %v1586, 1
        %v1707 = vsel %vm1602, %v1704, %v1706
        %v1708 = vrot.slane %v1587, 1
        %v1709 = vsel %vm1602, %v1706, %v1708
        %v1710 = vrot.slane %v1588, 1
        %v1711 = vsel %vm1602, %v1708, %v1710
        %v1712 = vrot.slane %v1589, 1
        %v1713 = vsel %vm1602, %v1710, %v1712
        %v1714 = vrot.slane %v1590, 1
        %v1715 = vsel %vm1602, %v1712, %v1714
        %v1716 = vrot.slane %v1591, 1
        %v1717 = vsel %vm1602, %v1714, %v1716
        %v1718 = vrot.slane %v1592, 1
        %v1719 = vsel %vm1602, %v1716, %v1718
        %v1728 = vadd.f32 %v1686, %v1705
        %v1729 = vadd.f32 %v1687, %v1707
        %v1730 = vadd.f32 %v1688, %v1709
        %v1731 = vadd.f32 %v1689, %v1711
        %v1732 = vadd.f32 %v1690, %v1713
        %v1733 = vadd.f32 %v1691, %v1715
        %v1734 = vadd.f32 %v1692, %v1717
        %v1735 = vadd.f32 %v1693, %v1719
        %v1736 = vld [vmem:[#allocation14] sm:$0x1]
        %v1737 = vld [vmem:[#allocation15] sm:$0xf]
        %v1738 = vld [vmem:[#allocation15 + $0x4] sm:$0xf]
        %v1739 = vld [vmem:[#allocation15 + $0x8] sm:$0xf]
        %v1740 = vld [vmem:[#allocation15 + $0xc] sm:$0xf]
        %v1741 = vld [vmem:[#allocation15 + $0x10] sm:$0xf]
        %v1742 = vld [vmem:[#allocation15 + $0x14] sm:$0xf]
        %v1743 = vld [vmem:[#allocation15 + $0x18] sm:$0xf]
        %v1744 = vld [vmem:[#allocation15 + $0x1c] sm:$0xf]
        %v1745 = vld [vmem:[#allocation15 + $0x20] sm:$0xf]
        %v1746 = vld [vmem:[#allocation15 + $0x24] sm:$0xf]
        %v1747 = vld [vmem:[#allocation15 + $0x28] sm:$0xf]
        %v1748 = vld [vmem:[#allocation15 + $0x2c] sm:$0xf]
        %v1749 = vld [vmem:[#allocation15 + $0x30] sm:$0xf]
        %v1750 = vld [vmem:[#allocation15 + $0x34] sm:$0xf]
        %v1751 = vld [vmem:[#allocation15 + $0x38] sm:$0xf]
        %v1752 = vld [vmem:[#allocation15 + $0x3c] sm:$0xf]
        %v1753 = vld [vmem:[#allocation17] sm:$0x1]
        %v1755 = vlaneseq
        %v1756 = vshrl.u32 %v1755, 7
        %v1757 = vsub.s32 0, %v1756
        %v1758 = vrot.slane %v1736, %v1757
        %v1760 = vadd.f32 %v830, %v1758
        %v1761 = vadd.f32 %v834, %v1758
        %v1762 = vadd.f32 %v840, %v1758
        %v1763 = vadd.f32 %v844, %v1758
        %v1764 = vadd.f32 %v850, %v1758
        %v1765 = vadd.f32 %v854, %v1758
        %v1766 = vadd.f32 %v860, %v1758
        %v1767 = vadd.f32 %v864, %v1758
        %v1768 = vmax.f32 %v1760, 0.0
        %v1769 = vmax.f32 %v1761, 0.0
        %v1770 = vmax.f32 %v1762, 0.0
        %v1771 = vmax.f32 %v1763, 0.0
        %v1772 = vmax.f32 %v1764, 0.0
        %v1773 = vmax.f32 %v1765, 0.0
        %v1774 = vmax.f32 %v1766, 0.0
        %v1775 = vmax.f32 %v1767, 0.0
        %v1776 = vpack.c.bf16 %v1769, %v1768
        %v1777 = vpack.c.bf16 %v1771, %v1770
        %v1778 = vpack.c.bf16 %v1773, %v1772
        %v1779 = vpack.c.bf16 %v1775, %v1774
        %v1781 = vlaneseq
        %v1782 = vshrl.u32 %v1781, 7
        %v1783 = vsub.s32 0, %v1782
        %v1784 = vrot.slane %v1753, %v1783
        %v1802 = vunpack.c.l.b16 %v1737
        %v1803 = vunpack.c.l.b16 %v1738
        %v1804 = vunpack.c.l.b16 %v1739
        %v1805 = vunpack.c.l.b16 %v1740
        %v1806 = vunpack.c.l.b16 %v1741
        %v1807 = vunpack.c.l.b16 %v1742
        %v1808 = vunpack.c.l.b16 %v1743
        %v1809 = vunpack.c.l.b16 %v1744
        %v1810 = vunpack.c.l.b16 %v1745
        %v1811 = vunpack.c.l.b16 %v1746
        %v1812 = vunpack.c.l.b16 %v1747
        %v1813 = vunpack.c.l.b16 %v1748
        %v1814 = vunpack.c.l.b16 %v1749
        %v1815 = vunpack.c.l.b16 %v1750
        %v1816 = vunpack.c.l.b16 %v1751
        %v1817 = vunpack.c.l.b16 %v1752
        %v1818 = vpack.c.b16 %v1803, %v1802
        %v1819 = vpack.c.b16 %v1805, %v1804
        %v1820 = vpack.c.b16 %v1807, %v1806
        %v1821 = vpack.c.b16 %v1809, %v1808
        %v1822 = vpack.c.b16 %v1811, %v1810
        %v1823 = vpack.c.b16 %v1813, %v1812
        %v1824 = vpack.c.b16 %v1815, %v1814
        %v1825 = vpack.c.b16 %v1817, %v1816
        %1834 = vmatprep.subr.bf16.mxu0 0
        %1835 = vmatpush1.bf16.msra.mxu0 %v1818
        %1836 = vmatprep.subr.bf16.mxu0 0
        %1837 = vmatpush1.bf16.msra.mxu0 %v1819
        %1838 = vmatprep.subr.bf16.mxu0 0
        %1839 = vmatpush1.bf16.msra.mxu0 %v1820
        %1840 = vmatprep.subr.bf16.mxu0 0
        %1841 = vmatpush1.bf16.msra.mxu0 %v1821
        %1842 = vmatprep.subr.bf16.mxu0 0
        %1843 = vmatpush1.bf16.msra.mxu0 %v1822
        %1844 = vmatprep.subr.bf16.mxu0 0
        %1845 = vmatpush1.bf16.msra.mxu0 %v1823
        %1846 = vmatprep.subr.bf16.mxu0 0
        %1847 = vmatpush1.bf16.msra.mxu0 %v1824
        %1848 = vmatprep.subr.bf16.mxu0 0
        %1849 = vmatpush1.bf16.msra.mxu0 %v1825
        %1850 = vmatprep.subr.bf16.mxu0 0
        %1851 = vmatpush1.bf16.msra.mxu0 0
        %1852 = vmatprep.subr.bf16.mxu0 0
        %1853 = vmatpush1.bf16.msra.mxu0 0
        %1854 = vmatprep.subr.bf16.mxu0 0
        %1855 = vmatpush1.bf16.msra.mxu0 0
        %1856 = vmatprep.subr.bf16.mxu0 0
        %1857 = vmatpush1.bf16.msra.mxu0 0
        %1858 = vmatprep.subr.bf16.mxu0 0
        %1859 = vmatpush1.bf16.msra.mxu0 0
        %1860 = vmatprep.subr.bf16.mxu0 0
        %1861 = vmatpush1.bf16.msra.mxu0 0
        %1862 = vmatprep.subr.bf16.mxu0 0
        %1863 = vmatpush1.bf16.msra.mxu0 0
        %1864 = vmatprep.subr.bf16.mxu0 0
        %1865 = vmatpush1.bf16.msra.mxu0 0
        %1866 = vmatprep.mubr.bf16.mxu0 0
        %1867 = vmatmul.mubr.bf16.gmra.mrb[0].mxu0 %v1776
        %v1868 = vpop.f32.mrb[0].mxu0
        %v1869 = vadd.f32 %v1784, %v1868
        %v1870 = vpop.f32.mrb[0].mxu0
        %v1871 = vpop.f32.mrb[0].mxu0
        %v1872 = vadd.f32 %v1784, %v1871
        %v1873 = vpop.f32.mrb[0].mxu0
        %1874 = vmatprep.mubr.bf16.mxu0 0
        %1875 = vmatmul.mubr.bf16.gmra.mrb[0].mxu0 %v1777
        %v1876 = vpop.f32.mrb[0].mxu0
        %v1877 = vadd.f32 %v1784, %v1876
        %v1878 = vpop.f32.mrb[0].mxu0
        %v1879 = vpop.f32.mrb[0].mxu0
        %v1880 = vadd.f32 %v1784, %v1879
        %v1881 = vpop.f32.mrb[0].mxu0
        %1882 = vmatprep.mubr.bf16.mxu0 0
        %1883 = vmatmul.mubr.bf16.gmra.mrb[0].mxu0 %v1778
        %v1884 = vpop.f32.mrb[0].mxu0
        %v1885 = vadd.f32 %v1784, %v1884
        %v1886 = vpop.f32.mrb[0].mxu0
        %v1887 = vpop.f32.mrb[0].mxu0
        %v1888 = vadd.f32 %v1784, %v1887
        %v1889 = vpop.f32.mrb[0].mxu0
        %1890 = vmatprep.mubr.bf16.mxu0 0
        %1891 = vmatmul.mubr.bf16.gmra.mrb[0].mxu0 %v1779
        %v1892 = vpop.f32.mrb[0].mxu0
        %v1893 = vadd.f32 %v1784, %v1892
        %v1894 = vpop.f32.mrb[0].mxu0
        %v1895 = vpop.f32.mrb[0].mxu0
        %v1896 = vadd.f32 %v1784, %v1895
        %v1897 = vpop.f32.mrb[0].mxu0
        %1898 = vdwg.mxu0
        %v1899 = vmax.f32 %v1869, 0.0
        %v1900 = vmax.f32 %v1872, 0.0
        %v1901 = vmax.f32 %v1877, 0.0
        %v1902 = vmax.f32 %v1880, 0.0
        %v1903 = vmax.f32 %v1885, 0.0
        %v1904 = vmax.f32 %v1888, 0.0
        %v1905 = vmax.f32 %v1893, 0.0
        %v1906 = vmax.f32 %v1896, 0.0
        %v1907 = vpack.c.bf16 %v1900, %v1899
        %v1908 = vpack.c.bf16 %v1902, %v1901
        %v1909 = vpack.c.bf16 %v1904, %v1903
        %v1910 = vpack.c.bf16 %v1906, %v1905
        %v1915 = vunpack.c.l.b16 %v1907
        %v1916 = vunpack.c.h.b16 %v1907
        %v1917 = vunpack.c.l.b16 %v1908
        %v1918 = vunpack.c.h.b16 %v1908
        %v1919 = vunpack.c.l.b16 %v1909
        %v1920 = vunpack.c.h.b16 %v1909
        %v1921 = vunpack.c.l.b16 %v1910
        %v1922 = vunpack.c.h.b16 %v1910
        %v1923 = vpack.c.b16 %v1915, %v1915
        %v1924 = vpack.c.b16 %v1916, %v1916
        %v1925 = vpack.c.b16 %v1917, %v1917
        %v1926 = vpack.c.b16 %v1918, %v1918
        %v1927 = vpack.c.b16 %v1919, %v1919
        %v1928 = vpack.c.b16 %v1920, %v1920
        %v1929 = vpack.c.b16 %v1921, %v1921
        %v1930 = vpack.c.b16 %v1922, %v1922
        %1939 = vst [vmem:[%s460] sm:$0xf] %v1923
        %1940 = vst [vmem:[%s460 + $0x4] sm:$0xf] %v1924
        %1941 = vst [vmem:[%s460 + $0x8] sm:$0xf] %v1925
        %1942 = vst [vmem:[%s460 + $0xc] sm:$0xf] %v1926
        %1943 = vst [vmem:[%s460 + $0x10] sm:$0xf] %v1927
        %1944 = vst [vmem:[%s460 + $0x14] sm:$0xf] %v1928
        %1945 = vst [vmem:[%s460 + $0x18] sm:$0xf] %v1929
        %1946 = vst [vmem:[%s460 + $0x1c] sm:$0xf] %v1930
        %v1947 = vadd.f32 %v1628, %v1758
        %v1948 = vadd.f32 %v1629, %v1758
        %v1949 = vadd.f32 %v1630, %v1758
        %v1950 = vadd.f32 %v1631, %v1758
        %v1951 = vadd.f32 %v1632, %v1758
        %v1952 = vadd.f32 %v1633, %v1758
        %v1953 = vadd.f32 %v1634, %v1758
        %v1954 = vadd.f32 %v1635, %v1758
        %v1955 = vmax.f32 %v1947, 0.0
        %v1956 = vmax.f32 %v1948, 0.0
        %v1957 = vmax.f32 %v1949, 0.0
        %v1958 = vmax.f32 %v1950, 0.0
        %v1959 = vmax.f32 %v1951, 0.0
        %v1960 = vmax.f32 %v1952, 0.0
        %v1961 = vmax.f32 %v1953, 0.0
        %v1962 = vmax.f32 %v1954, 0.0
        %v1963 = vpack.c.bf16 %v1956, %v1955
        %v1964 = vpack.c.bf16 %v1958, %v1957
        %v1965 = vpack.c.bf16 %v1960, %v1959
        %v1966 = vpack.c.bf16 %v1962, %v1961
        %1967 = vmatprep.subr.bf16.mxu0 0
        %1968 = vmatpush1.bf16.msra.mxu0 %v1818
        %1969 = vmatprep.subr.bf16.mxu0 0
        %1970 = vmatpush1.bf16.msra.mxu0 %v1819
        %1971 = vmatprep.subr.bf16.mxu0 0
        %1972 = vmatpush1.bf16.msra.mxu0 %v1820
        %1973 = vmatprep.subr.bf16.mxu0 0
        %1974 = vmatpush1.bf16.msra.mxu0 %v1821
        %1975 = vmatprep.subr.bf16.mxu0 0
        %1976 = vmatpush1.bf16.msra.mxu0 %v1822
        %1977 = vmatprep.subr.bf16.mxu0 0
        %1978 = vmatpush1.bf16.msra.mxu0 %v1823
        %1979 = vmatprep.subr.bf16.mxu0 0
        %1980 = vmatpush1.bf16.msra.mxu0 %v1824
        %1981 = vmatprep.subr.bf16.mxu0 0
        %1982 = vmatpush1.bf16.msra.mxu0 %v1825
        %1983 = vmatprep.subr.bf16.mxu0 0
        %1984 = vmatpush1.bf16.msra.mxu0 0
        %1985 = vmatprep.subr.bf16.mxu0 0
        %1986 = vmatpush1.bf16.msra.mxu0 0
        %1987 = vmatprep.subr.bf16.mxu0 0
        %1988 = vmatpush1.bf16.msra.mxu0 0
        %1989 = vmatprep.subr.bf16.mxu0 0
        %1990 = vmatpush1.bf16.msra.mxu0 0
        %1991 = vmatprep.subr.bf16.mxu0 0
        %1992 = vmatpush1.bf16.msra.mxu0 0
        %1993 = vmatprep.subr.bf16.mxu0 0
        %1994 = vmatpush1.bf16.msra.mxu0 0
        %1995 = vmatprep.subr.bf16.mxu0 0
        %1996 = vmatpush1.bf16.msra.mxu0 0
        %1997 = vmatprep.subr.bf16.mxu0 0
        %1998 = vmatpush1.bf16.msra.mxu0 0
        %1999 = vmatprep.mubr.bf16.mxu0 0
        %2000 = vmatmul.mubr.bf16.gmra.mrb[0].mxu0 %v1963
        %v2001 = vpop.f32.mrb[0].mxu0
        %v2002 = vadd.f32 %v1784, %v2001
        %v2003 = vpop.f32.mrb[0].mxu0
        %v2004 = vpop.f32.mrb[0].mxu0
        %v2005 = vadd.f32 %v1784, %v2004
        %v2006 = vpop.f32.mrb[0].mxu0
        %2007 = vmatprep.mubr.bf16.mxu0 0
        %2008 = vmatmul.mubr.bf16.gmra.mrb[0].mxu0 %v1964
        %v2009 = vpop.f32.mrb[0].mxu0
        %v2010 = vadd.f32 %v1784, %v2009
        %v2011 = vpop.f32.mrb[0].mxu0
        %v2012 = vpop.f32.mrb[0].mxu0
        %v2013 = vadd.f32 %v1784, %v2012
        %v2014 = vpop.f32.mrb[0].mxu0
        %2015 = vmatprep.mubr.bf16.mxu0 0
        %2016 = vmatmul.mubr.bf16.gmra.mrb[0].mxu0 %v1965
        %v2017 = vpop.f32.mrb[0].mxu0
        %v2018 = vadd.f32 %v1784, %v2017
        %v2019 = vpop.f32.mrb[0].mxu0
        %v2020 = vpop.f32.mrb[0].mxu0
        %v2021 = vadd.f32 %v1784, %v2020
        %v2022 = vpop.f32.mrb[0].mxu0
        %2023 = vmatprep.mubr.bf16.mxu0 0
        %2024 = vmatmul.mubr.bf16.gmra.mrb[0].mxu0 %v1966
        %v2025 = vpop.f32.mrb[0].mxu0
        %v2026 = vadd.f32 %v1784, %v2025
        %v2027 = vpop.f32.mrb[0].mxu0
        %v2028 = vpop.f32.mrb[0].mxu0
        %v2029 = vadd.f32 %v1784, %v2028
        %v2030 = vpop.f32.mrb[0].mxu0
        %2031 = vdwg.mxu0
        %v2032 = vmax.f32 %v2002, 0.0
        %v2033 = vmax.f32 %v2005, 0.0
        %v2034 = vmax.f32 %v2010, 0.0
        %v2035 = vmax.f32 %v2013, 0.0
        %v2036 = vmax.f32 %v2018, 0.0
        %v2037 = vmax.f32 %v2021, 0.0
        %v2038 = vmax.f32 %v2026, 0.0
        %v2039 = vmax.f32 %v2029, 0.0
        %v2040 = vpack.c.bf16 %v2033, %v2032
        %v2041 = vpack.c.bf16 %v2035, %v2034
        %v2042 = vpack.c.bf16 %v2037, %v2036
        %v2043 = vpack.c.bf16 %v2039, %v2038
        %v2048 = vunpack.c.l.b16 %v2040
        %v2049 = vunpack.c.h.b16 %v2040
        %v2050 = vunpack.c.l.b16 %v2041
        %v2051 = vunpack.c.h.b16 %v2041
        %v2052 = vunpack.c.l.b16 %v2042
        %v2053 = vunpack.c.h.b16 %v2042
        %v2054 = vunpack.c.l.b16 %v2043
        %v2055 = vunpack.c.h.b16 %v2043
        %v2056 = vpack.c.b16 %v2048, %v2048
        %v2057 = vpack.c.b16 %v2049, %v2049
        %v2058 = vpack.c.b16 %v2050, %v2050
        %v2059 = vpack.c.b16 %v2051, %v2051
        %v2060 = vpack.c.b16 %v2052, %v2052
        %v2061 = vpack.c.b16 %v2053, %v2053
        %v2062 = vpack.c.b16 %v2054, %v2054
        %v2063 = vpack.c.b16 %v2055, %v2055
        %s2072 = scalar_lea.vmem %s460, 32 [#allocation18]
        %2073 = vst [vmem:[%s2072] sm:$0xf] %v2056
        %2074 = vst [vmem:[%s2072 + $0x4] sm:$0xf] %v2057
        %2075 = vst [vmem:[%s2072 + $0x8] sm:$0xf] %v2058
        %2076 = vst [vmem:[%s2072 + $0xc] sm:$0xf] %v2059
        %2077 = vst [vmem:[%s2072 + $0x10] sm:$0xf] %v2060
        %2078 = vst [vmem:[%s2072 + $0x14] sm:$0xf] %v2061
        %2079 = vst [vmem:[%s2072 + $0x18] sm:$0xf] %v2062
        %2080 = vst [vmem:[%s2072 + $0x1c] sm:$0xf] %v2063
        %v2081 = vadd.f32 %v1636, %v1758
        %v2082 = vadd.f32 %v1637, %v1758
        %v2083 = vadd.f32 %v1638, %v1758
        %v2084 = vadd.f32 %v1639, %v1758
        %v2085 = vadd.f32 %v1640, %v1758
        %v2086 = vadd.f32 %v1641, %v1758
        %v2087 = vadd.f32 %v1642, %v1758
        %v2088 = vadd.f32 %v1643, %v1758
        %v2089 = vmax.f32 %v2081, 0.0
        %v2090 = vmax.f32 %v2082, 0.0
        %v2091 = vmax.f32 %v2083, 0.0
        %v2092 = vmax.f32 %v2084, 0.0
        %v2093 = vmax.f32 %v2085, 0.0
        %v2094 = vmax.f32 %v2086, 0.0
        %v2095 = vmax.f32 %v2087, 0.0
        %v2096 = vmax.f32 %v2088, 0.0
        %v2097 = vpack.c.bf16 %v2090, %v2089
        %v2098 = vpack.c.bf16 %v2092, %v2091
        %v2099 = vpack.c.bf16 %v2094, %v2093
        %v2100 = vpack.c.bf16 %v2096, %v2095
        %2101 = vmatprep.subr.bf16.mxu0 0
        %2102 = vmatpush1.bf16.msra.mxu0 %v1818
        %2103 = vmatprep.subr.bf16.mxu0 0
        %2104 = vmatpush1.bf16.msra.mxu0 %v1819
        %2105 = vmatprep.subr.bf16.mxu0 0
        %2106 = vmatpush1.bf16.msra.mxu0 %v1820
        %2107 = vmatprep.subr.bf16.mxu0 0
        %2108 = vmatpush1.bf16.msra.mxu0 %v1821
        %2109 = vmatprep.subr.bf16.mxu0 0
        %2110 = vmatpush1.bf16.msra.mxu0 %v1822
        %2111 = vmatprep.subr.bf16.mxu0 0
        %2112 = vmatpush1.bf16.msra.mxu0 %v1823
        %2113 = vmatprep.subr.bf16.mxu0 0
        %2114 = vmatpush1.bf16.msra.mxu0 %v1824
        %2115 = vmatprep.subr.bf16.mxu0 0
        %2116 = vmatpush1.bf16.msra.mxu0 %v1825
        %2117 = vmatprep.subr.bf16.mxu0 0
        %2118 = vmatpush1.bf16.msra.mxu0 0
        %2119 = vmatprep.subr.bf16.mxu0 0
        %2120 = vmatpush1.bf16.msra.mxu0 0
        %2121 = vmatprep.subr.bf16.mxu0 0
        %2122 = vmatpush1.bf16.msra.mxu0 0
        %2123 = vmatprep.subr.bf16.mxu0 0
        %2124 = vmatpush1.bf16.msra.mxu0 0
        %2125 = vmatprep.subr.bf16.mxu0 0
        %2126 = vmatpush1.bf16.msra.mxu0 0
        %2127 = vmatprep.subr.bf16.mxu0 0
        %2128 = vmatpush1.bf16.msra.mxu0 0
        %2129 = vmatprep.subr.bf16.mxu0 0
        %2130 = vmatpush1.bf16.msra.mxu0 0
        %2131 = vmatprep.subr.bf16.mxu0 0
        %2132 = vmatpush1.bf16.msra.mxu0 0
        %2133 = vmatprep.mubr.bf16.mxu0 0
        %2134 = vmatmul.mubr.bf16.gmra.mrb[0].mxu0 %v2097
        %v2135 = vpop.f32.mrb[0].mxu0
        %v2136 = vadd.f32 %v1784, %v2135
        %v2137 = vpop.f32.mrb[0].mxu0
        %v2138 = vpop.f32.mrb[0].mxu0
        %v2139 = vadd.f32 %v1784, %v2138
        %v2140 = vpop.f32.mrb[0].mxu0
        %2141 = vmatprep.mubr.bf16.mxu0 0
        %2142 = vmatmul.mubr.bf16.gmra.mrb[0].mxu0 %v2098
        %v2143 = vpop.f32.mrb[0].mxu0
        %v2144 = vadd.f32 %v1784, %v2143
        %v2145 = vpop.f32.mrb[0].mxu0
        %v2146 = vpop.f32.mrb[0].mxu0
        %v2147 = vadd.f32 %v1784, %v2146
        %v2148 = vpop.f32.mrb[0].mxu0
        %2149 = vmatprep.mubr.bf16.mxu0 0
        %2150 = vmatmul.mubr.bf16.gmra.mrb[0].mxu0 %v2099
        %v2151 = vpop.f32.mrb[0].mxu0
        %v2152 = vadd.f32 %v1784, %v2151
        %v2153 = vpop.f32.mrb[0].mxu0
        %v2154 = vpop.f32.mrb[0].mxu0
        %v2155 = vadd.f32 %v1784, %v2154
        %v2156 = vpop.f32.mrb[0].mxu0
        %2157 = vmatprep.mubr.bf16.mxu0 0
        %2158 = vmatmul.mubr.bf16.gmra.mrb[0].mxu0 %v2100
        %v2159 = vpop.f32.mrb[0].mxu0
        %v2160 = vadd.f32 %v1784, %v2159
        %v2161 = vpop.f32.mrb[0].mxu0
        %v2162 = vpop.f32.mrb[0].mxu0
        %v2163 = vadd.f32 %v1784, %v2162
        %v2164 = vpop.f32.mrb[0].mxu0
        %2165 = vdwg.mxu0
        %v2166 = vmax.f32 %v2136, 0.0
        %v2167 = vmax.f32 %v2139, 0.0
        %v2168 = vmax.f32 %v2144, 0.0
        %v2169 = vmax.f32 %v2147, 0.0
        %v2170 = vmax.f32 %v2152, 0.0
        %v2171 = vmax.f32 %v2155, 0.0
        %v2172 = vmax.f32 %v2160, 0.0
        %v2173 = vmax.f32 %v2163, 0.0
        %v2174 = vpack.c.bf16 %v2167, %v2166
        %v2175 = vpack.c.bf16 %v2169, %v2168
        %v2176 = vpack.c.bf16 %v2171, %v2170
        %v2177 = vpack.c.bf16 %v2173, %v2172
        %v2182 = vunpack.c.l.b16 %v2174
        %v2183 = vunpack.c.h.b16 %v2174
        %v2184 = vunpack.c.l.b16 %v2175
        %v2185 = vunpack.c.h.b16 %v2175
        %v2186 = vunpack.c.l.b16 %v2176
        %v2187 = vunpack.c.h.b16 %v2176
        %v2188 = vunpack.c.l.b16 %v2177
        %v2189 = vunpack.c.h.b16 %v2177
        %v2190 = vpack.c.b16 %v2182, %v2182
        %v2191 = vpack.c.b16 %v2183, %v2183
        %v2192 = vpack.c.b16 %v2184, %v2184
        %v2193 = vpack.c.b16 %v2185, %v2185
        %v2194 = vpack.c.b16 %v2186, %v2186
        %v2195 = vpack.c.b16 %v2187, %v2187
        %v2196 = vpack.c.b16 %v2188, %v2188
        %v2197 = vpack.c.b16 %v2189, %v2189
        %s2206 = scalar_lea.vmem %s460, 64 [#allocation18]
        %2207 = vst [vmem:[%s2206] sm:$0xf] %v2190
        %2208 = vst [vmem:[%s2206 + $0x4] sm:$0xf] %v2191
        %2209 = vst [vmem:[%s2206 + $0x8] sm:$0xf] %v2192
        %2210 = vst [vmem:[%s2206 + $0xc] sm:$0xf] %v2193
        %2211 = vst [vmem:[%s2206 + $0x10] sm:$0xf] %v2194
        %2212 = vst [vmem:[%s2206 + $0x14] sm:$0xf] %v2195
        %2213 = vst [vmem:[%s2206 + $0x18] sm:$0xf] %v2196
        %2214 = vst [vmem:[%s2206 + $0x1c] sm:$0xf] %v2197
        %v2215 = vadd.f32 %v1728, %v1758
        %v2216 = vadd.f32 %v1729, %v1758
        %v2217 = vadd.f32 %v1730, %v1758
        %v2218 = vadd.f32 %v1731, %v1758
        %v2219 = vadd.f32 %v1732, %v1758
        %v2220 = vadd.f32 %v1733, %v1758
        %v2221 = vadd.f32 %v1734, %v1758
        %v2222 = vadd.f32 %v1735, %v1758
        %v2223 = vmax.f32 %v2215, 0.0
        %v2224 = vmax.f32 %v2216, 0.0
        %v2225 = vmax.f32 %v2217, 0.0
        %v2226 = vmax.f32 %v2218, 0.0
        %v2227 = vmax.f32 %v2219, 0.0
        %v2228 = vmax.f32 %v2220, 0.0
        %v2229 = vmax.f32 %v2221, 0.0
        %v2230 = vmax.f32 %v2222, 0.0
        %v2231 = vpack.c.bf16 %v2224, %v2223
        %v2232 = vpack.c.bf16 %v2226, %v2225
        %v2233 = vpack.c.bf16 %v2228, %v2227
        %v2234 = vpack.c.bf16 %v2230, %v2229
        %2235 = vmatprep.subr.bf16.mxu0 0
        %2236 = vmatpush1.bf16.msra.mxu0 %v1818
        %2237 = vmatprep.subr.bf16.mxu0 0
        %2238 = vmatpush1.bf16.msra.mxu0 %v1819
        %2239 = vmatprep.subr.bf16.mxu0 0
        %2240 = vmatpush1.bf16.msra.mxu0 %v1820
        %2241 = vmatprep.subr.bf16.mxu0 0
        %2242 = vmatpush1.bf16.msra.mxu0 %v1821
        %2243 = vmatprep.subr.bf16.mxu0 0
        %2244 = vmatpush1.bf16.msra.mxu0 %v1822
        %2245 = vmatprep.subr.bf16.mxu0 0
        %2246 = vmatpush1.bf16.msra.mxu0 %v1823
        %2247 = vmatprep.subr.bf16.mxu0 0
        %2248 = vmatpush1.bf16.msra.mxu0 %v1824
        %2249 = vmatprep.subr.bf16.mxu0 0
        %2250 = vmatpush1.bf16.msra.mxu0 %v1825
        %2251 = vmatprep.subr.bf16.mxu0 0
        %2252 = vmatpush1.bf16.msra.mxu0 0
        %2253 = vmatprep.subr.bf16.mxu0 0
        %2254 = vmatpush1.bf16.msra.mxu0 0
        %2255 = vmatprep.subr.bf16.mxu0 0
        %2256 = vmatpush1.bf16.msra.mxu0 0
        %2257 = vmatprep.subr.bf16.mxu0 0
        %2258 = vmatpush1.bf16.msra.mxu0 0
        %2259 = vmatprep.subr.bf16.mxu0 0
        %2260 = vmatpush1.bf16.msra.mxu0 0
        %2261 = vmatprep.subr.bf16.mxu0 0
        %2262 = vmatpush1.bf16.msra.mxu0 0
        %2263 = vmatprep.subr.bf16.mxu0 0
        %2264 = vmatpush1.bf16.msra.mxu0 0
        %2265 = vmatprep.subr.bf16.mxu0 0
        %2266 = vmatpush1.bf16.msra.mxu0 0
        %2267 = vmatprep.mubr.bf16.mxu0 0
        %2268 = vmatmul.mubr.bf16.gmra.mrb[0].mxu0 %v2231
        %v2269 = vpop.f32.mrb[0].mxu0
        %v2270 = vadd.f32 %v1784, %v2269
        %v2271 = vpop.f32.mrb[0].mxu0
        %v2272 = vpop.f32.mrb[0].mxu0
        %v2273 = vadd.f32 %v1784, %v2272
        %v2274 = vpop.f32.mrb[0].mxu0
        %2275 = vmatprep.mubr.bf16.mxu0 0
        %2276 = vmatmul.mubr.bf16.gmra.mrb[0].mxu0 %v2232
        %v2277 = vpop.f32.mrb[0].mxu0
        %v2278 = vadd.f32 %v1784, %v2277
        %v2279 = vpop.f32.mrb[0].mxu0
        %v2280 = vpop.f32.mrb[0].mxu0
        %v2281 = vadd.f32 %v1784, %v2280
        %v2282 = vpop.f32.mrb[0].mxu0
        %2283 = vmatprep.mubr.bf16.mxu0 0
        %2284 = vmatmul.mubr.bf16.gmra.mrb[0].mxu0 %v2233
        %v2285 = vpop.f32.mrb[0].mxu0
        %v2286 = vadd.f32 %v1784, %v2285
        %v2287 = vpop.f32.mrb[0].mxu0
        %v2288 = vpop.f32.mrb[0].mxu0
        %v2289 = vadd.f32 %v1784, %v2288
        %v2290 = vpop.f32.mrb[0].mxu0
        %2291 = vmatprep.mubr.bf16.mxu0 0
        %2292 = vmatmul.mubr.bf16.gmra.mrb[0].mxu0 %v2234
        %v2293 = vpop.f32.mrb[0].mxu0
        %v2294 = vadd.f32 %v1784, %v2293
        %v2295 = vpop.f32.mrb[0].mxu0
        %v2296 = vpop.f32.mrb[0].mxu0
        %v2297 = vadd.f32 %v1784, %v2296
        %v2298 = vpop.f32.mrb[0].mxu0
        %2299 = vdwg.mxu0
        %v2300 = vmax.f32 %v2270, 0.0
        %v2301 = vmax.f32 %v2273, 0.0
        %v2302 = vmax.f32 %v2278, 0.0
        %v2303 = vmax.f32 %v2281, 0.0
        %v2304 = vmax.f32 %v2286, 0.0
        %v2305 = vmax.f32 %v2289, 0.0
        %v2306 = vmax.f32 %v2294, 0.0
        %v2307 = vmax.f32 %v2297, 0.0
        %v2308 = vpack.c.bf16 %v2301, %v2300
        %v2309 = vpack.c.bf16 %v2303, %v2302
        %v2310 = vpack.c.bf16 %v2305, %v2304
        %v2311 = vpack.c.bf16 %v2307, %v2306
        %v2316 = vunpack.c.l.b16 %v2308
        %v2317 = vunpack.c.h.b16 %v2308
        %v2318 = vunpack.c.l.b16 %v2309
        %v2319 = vunpack.c.h.b16 %v2309
        %v2320 = vunpack.c.l.b16 %v2310
        %v2321 = vunpack.c.h.b16 %v2310
        %v2322 = vunpack.c.l.b16 %v2311
        %v2323 = vunpack.c.h.b16 %v2311
        %v2324 = vpack.c.b16 %v2316, %v2316
        %v2325 = vpack.c.b16 %v2317, %v2317
        %v2326 = vpack.c.b16 %v2318, %v2318
        %v2327 = vpack.c.b16 %v2319, %v2319
        %v2328 = vpack.c.b16 %v2320, %v2320
        %v2329 = vpack.c.b16 %v2321, %v2321
        %v2330 = vpack.c.b16 %v2322, %v2322
        %v2331 = vpack.c.b16 %v2323, %v2323
        %s2340 = scalar_lea.vmem %s460, 96 [#allocation18]
        %2341 = vst [vmem:[%s2340] sm:$0xf] %v2324
        %2342 = vst [vmem:[%s2340 + $0x4] sm:$0xf] %v2325
        %2343 = vst [vmem:[%s2340 + $0x8] sm:$0xf] %v2326
        %2344 = vst [vmem:[%s2340 + $0xc] sm:$0xf] %v2327
        %2345 = vst [vmem:[%s2340 + $0x10] sm:$0xf] %v2328
        %2346 = vst [vmem:[%s2340 + $0x14] sm:$0xf] %v2329
        %2347 = vst [vmem:[%s2340 + $0x18] sm:$0xf] %v2330
        %2348 = vst [vmem:[%s2340 + $0x1c] sm:$0xf] %v2331
        %s2349 = sand.u32 %s232, 1
        %s2350 = scalar_lea.sflag [#allocation5], %s2349
        %s2351 = sand.u32 %s232, 1
        %s2352 = smul.addr %s2351, 128
        %s2353 = scalar_lea.vmem [#allocation18], %s2352
        // Predicated region
        $region93: #{tpu_custom_call.1} parent=55 // pred_check
          %p2354 = pneg %p242
        $region94: #{tpu_custom_call.1} parent=55 // pred_check_branch
          %2356 = sbr.rel (%p2354) target = $region96
        $region95: #{tpu_custom_call.1} parent=55 // pred_region
          %s2358 = ssub.s32 2048, 2048
          %2359 = vsyncadd %s2350, %s2358
          %s2360 = smul.addr %s30, 32
          %s2361 = smul.addr %s2360, 64
          %s2362 = scalar_lea.hbm %s9, %s2361
          %s2363 = sshll.u32 %s2353, 4
          %s2364 = int_to_ptr.vmem [resolvable:$true] %s2363
          %2369 = dma.vmem_to_hbm [thread:$0]  %s2364, 2048, %s2362, %s2350, 64, 64, 4
        $region96: #{tpu_custom_call.1} parent=55 // pred_fallthru
          _
      $region56: #{tpu_custom_call.1} parent=5 // pred_fallthru
        _
      %p2370 = scmp.le.s32.totalorder 2, %s25
      // Predicated region
      $region97: #{tpu_custom_call.1} parent=5 // pred_check
        %p2371 = pneg %p2370
      $region98: #{tpu_custom_call.1} parent=5 // pred_check_branch
        %2373 = sbr.rel (%p2371) target = $region100
      $region99: #{tpu_custom_call.1} parent=5 // pred_region
        %s2374 = ssub.s32 %s25, 2
        // Predicated region
        $region101: #{tpu_custom_call.1} parent=99 // pred_check
          %p2375 = pneg %p248
        $region102: #{tpu_custom_call.1} parent=99 // pred_check_branch
          %2377 = sbr.rel (%p2375) target = $region104
        $region103: #{tpu_custom_call.1} parent=99 // pred_region
          %s2378 = sand.u32 %s233, 1
          %s2379 = scalar_lea.sflag [#allocation5], %s2378
          %s2380 = sand.u32 %s233, 1
          %s2381 = smul.addr %s2380, 128
          %s2382 = scalar_lea.vmem [#allocation18], %s2381
          %2383 = dma.done %s2379, 2048
        $region104: #{tpu_custom_call.1} parent=99 // pred_fallthru
          _
      $region100: #{tpu_custom_call.1} parent=5 // pred_fallthru
        _
    $region6: #{tpu_custom_call.1} parent=1 // loop_footer
      %s29 = sadd.s32 1, %s25
    $region7: #{tpu_custom_call.1} parent=1 // loop_footer_branch
      %24 = sbr.rel target = $region3
    $region8: #{tpu_custom_call.1} parent=1 // loop_exit
      _
    %2384 = vsyncpa [#allocation4], 1
    %s2385 = scalar_lea.sflag [#allocation4], 1
    %2386 = vsyncpa %s2385, 1
    %2387 = vsyncpa [#allocation7], 1
    %2388 = vsyncpa [#allocation10], 1
    %2389 = vsyncpa [#allocation13], 1
    %2390 = vsyncpa [#allocation16], 1
    %2391 = vsyncpa [#allocation5], 1
    %s2392 = scalar_lea.sflag [#allocation5], 1
    %2393 = vsyncpa %s2392, 1

</llo_original>
